<compile_context>
chip_gen: v5e
topology: v5e:2x2
jax: 0.10.0
libtpu: 0.0.40
codegen_flags: <defaults>
</compile_context>

<pallas_src>
import functools

import jax
import jax.numpy as jnp
from jax.experimental import pallas as pl
from jax.experimental.pallas import tpu as pltpu

LN_EPS = 1e-5


def _round_up(v, m):
    return ((v + m - 1) // m) * m


def hetnet_kernel(x_ref, w1_ref, b1_ref, g1_ref, beta1_ref,
                  wcat_ref, bcat_ref, wa2_ref, ba2_ref,
                  logits_ref, emb_ref):
    H = emb_ref.shape[-1]
    inv_h = 1.0 / H

    # ---- fc1 (MXU, bf16 x bf16 -> f32 accumulation); x cast in-kernel ----
    h = (jnp.dot(x_ref[...].astype(jnp.bfloat16), w1_ref[...],
                 preferred_element_type=jnp.float32)
         + b1_ref[...])

    # ---- LayerNorm(n_hidden), one-pass stats (two back-to-back XLU sums) ----
    s1 = jnp.sum(h, axis=-1, keepdims=True)
    s2 = jnp.sum(h * h, axis=-1, keepdims=True)
    mu = s1 * inv_h
    var = jnp.maximum(s2 * inv_h - mu * mu, 0.0)
    h = (h - mu) * jax.lax.rsqrt(var + LN_EPS) * g1_ref[...] + beta1_ref[...]

    # ---- ReLU (+ dropout == identity in eval) ----
    h = jnp.maximum(h, 0.0)
    h_bf = h.astype(jnp.bfloat16)

    # ---- fused [out | affinity_fc1] projection: one H x 2H MXU pass ----
    proj = (jnp.dot(h_bf, wcat_ref[...], preferred_element_type=jnp.float32)
            + bcat_ref[...])
    emb_ref[...] = proj[:, :H].astype(emb_ref.dtype)        # source node embedding
    a = jnp.maximum(proj[:, H:], 0.0).astype(jnp.bfloat16)

    # ---- final Linear(H, 1): wa2 is zero-padded to 8 rows so the NT matmul
    #      emits a sublane-aligned (8, block_n) result; row 0 is the logits
    #      row, stored lane-dense as (1, block_n). ba2 read as SMEM scalar. ----
    lg = jax.lax.dot_general(wa2_ref[...], a, (((1,), (1,)), ((), ())),
                             preferred_element_type=jnp.float32)
    logits_ref[...] = lg[0:1, :] + ba2_ref[0, 0]


def prepare_params(params):
    """One-time weight prep (hoisted out of the forward path)."""
    return {
        "w1": params["w1"].astype(jnp.bfloat16),                       # (F, H)
        "b1": params["b1"],                                            # (1, H)
        "g1": params["g1"],                                            # (1, H)
        "beta1": params["beta1"],                                      # (1, H)
        "wcat": jnp.concatenate([params["wout"], params["wa1"]],
                                axis=1).astype(jnp.bfloat16),          # (H, 2H)
        "bcat": jnp.concatenate([params["bout"], params["ba1"]], axis=1),
        "wa2": jnp.pad(params["wa2"], ((0, 7), (0, 0))).astype(jnp.bfloat16),
        "ba2": params["ba2"],                                          # (1, 1)
    }


def hetnet_forward(x, prep, block_n=None, out_dtype=jnp.float32):
    N, F = x.shape
    H = prep["w1"].shape[1]

    if block_n is None:
        # >= 2 node tiles so v7x's two TensorCores both get work; large tiles
        # so v5e/v6e amortize the ~0.35us per-grid-step overhead.
        block_n = max(128, min(2048, _round_up(pl.cdiv(N, 2), 128)))
    block_n = min(block_n, _round_up(N, 8))
    num_tiles = pl.cdiv(N, block_n)

    def resident(shape):
        return pl.BlockSpec(shape, lambda i, _s=shape: (0,) * len(_s))

    grid_spec = pltpu.PrefetchScalarGridSpec(
        num_scalar_prefetch=0,
        grid=(num_tiles,),
        in_specs=[
            # x streamed in f32, full-extent feature dim (no pad / no pre-cast).
            pl.BlockSpec((block_n, F), lambda i: (i, 0)),
            resident((F, H)),                                   # w1 (bf16)
            resident((1, H)),                                   # b1
            resident((1, H)),                                   # LN gamma
            resident((1, H)),                                   # LN beta
            resident((H, 2 * H)),                               # [wout | wa1] (bf16)
            resident((1, 2 * H)),                               # [bout | ba1]
            resident((8, H)),                                   # wa2 (8-row padded, bf16)
            pl.BlockSpec(memory_space=pltpu.MemorySpace.SMEM),  # ba2 scalar
        ],
        out_specs=[
            pl.BlockSpec((None, 1, block_n), lambda i: (i, 0, 0)),  # logits row/tile
            pl.BlockSpec((block_n, H), lambda i: (i, 0)),           # emb tile
        ],
    )

    weight_bytes = sum(int(v.size) * v.dtype.itemsize for v in prep.values())
    cost = pl.CostEstimate(
        flops=2 * N * (F * H + H * 2 * H + 8 * H),
        transcendentals=N,
        bytes_accessed=(int(x.size) * x.dtype.itemsize
                        + N * H * jnp.dtype(out_dtype).itemsize
                        + N * 4 + weight_bytes),
    )

    logits3d, emb = pl.pallas_call(
        hetnet_kernel,
        out_shape=(jax.ShapeDtypeStruct((num_tiles, 1, block_n), jnp.float32),
                   jax.ShapeDtypeStruct((N, H), out_dtype)),
        grid_spec=grid_spec,
        compiler_params=pltpu.CompilerParams(
            dimension_semantics=("parallel",),
            vmem_limit_bytes=32 * 1024 * 1024),
        cost_estimate=cost,
    )(x, prep["w1"], prep["b1"], prep["g1"], prep["beta1"],
      prep["wcat"], prep["bcat"], prep["wa2"], prep["ba2"])

    logits = jnp.reshape(logits3d, (-1,))
    if num_tiles * block_n != N:
        logits = logits[:N]          # tiny (N*4 bytes); emb needs no slice
    return logits, emb


def init_params(key, num_feature, n_hidden):
    ks = jax.random.split(key, 4)
    scale = 0.05
    return {
        # fc1: Linear(num_feature, n_hidden); stored as [F, H] (pre-transposed)
        "w1": scale * jax.random.normal(ks[0], (num_feature, n_hidden), jnp.float32),
        "b1": jnp.zeros((1, n_hidden), jnp.float32),
        # LayerNorm(n_hidden)
        "g1": jnp.ones((1, n_hidden), jnp.float32),
        "beta1": jnp.zeros((1, n_hidden), jnp.float32),
        # out: Linear(n_hidden, n_hidden)
        "wout": scale * jax.random.normal(ks[1], (n_hidden, n_hidden), jnp.float32),
        "bout": 0.01 * jnp.ones((1, n_hidden), jnp.float32),
        # affinity_score MLP: Linear(H,H) -> ReLU -> Linear(H,1)
        "wa1": scale * jax.random.normal(ks[2], (n_hidden, n_hidden), jnp.float32),
        "ba1": jnp.zeros((1, n_hidden), jnp.float32),
        # final Linear(H,1) weight stored as a [1, H] row
        "wa2": scale * jax.random.normal(ks[3], (1, n_hidden), jnp.float32),
        "ba2": jnp.zeros((1, 1), jnp.float32),
    }


def hetnet_reference(x, p, match_bf16=True):
    """Pure-JAX reference. With match_bf16=True it mirrors the kernel's
    bf16-input / f32-accumulate matmul precision."""
    cast = (lambda v: v.astype(jnp.bfloat16).astype(jnp.float32)) if match_bf16 \
        else (lambda v: v)
    h = cast(x) @ cast(p["w1"]) + p["b1"]
    mu = jnp.mean(h, axis=-1, keepdims=True)
    var = jnp.mean((h - mu) ** 2, axis=-1, keepdims=True)
    h = (h - mu) * jax.lax.rsqrt(var + LN_EPS) * p["g1"] + p["beta1"]
    h = jnp.maximum(h, 0.0)
    hb = cast(h)
    emb = hb @ cast(p["wout"]) + p["bout"]
    a = jnp.maximum(hb @ cast(p["wa1"]) + p["ba1"], 0.0)
    logits = jnp.reshape(
        jnp.sum(cast(a) * cast(p["wa2"]), axis=-1, keepdims=True) + p["ba2"], (-1,))
    return logits, emb


if __name__ == "__main__":
    N, F, H = 600, 64, 128          # nodes, num_feature, n_hidden
    key = jax.random.PRNGKey(0)
    kx, kp = jax.random.split(key)
    x = jax.random.normal(kx, (N, F), jnp.float32)
    params = init_params(kp, F, H)
    prep = jax.tree_util.tree_map(jax.device_put, prepare_params(params))

    fwd = jax.jit(functools.partial(hetnet_forward, out_dtype=jnp.float32))
    logits, emb = fwd(x, prep)
    jax.block_until_ready((logits, emb))

    assert logits.shape == (N,) and emb.shape == (N, H)

    # Tight check vs. a reference that mirrors the kernel's bf16 matmul inputs.
    ref_logits, ref_emb = hetnet_reference(x, params, match_bf16=True)
    assert jnp.allclose(logits, ref_logits, atol=2e-3, rtol=2e-3)
    assert jnp.allclose(emb, ref_emb, atol=2e-3, rtol=2e-3)

    # Sanity check vs. the pure-f32 module semantics (bf16 rounding tolerance).
    f32_logits, f32_emb = hetnet_reference(x, params, match_bf16=False)
    assert jnp.allclose(logits, f32_logits, atol=5e-2, rtol=5e-2)
    assert jnp.allclose(emb, f32_emb, atol=5e-2, rtol=5e-2)

    print("KERNEL_OK")
</pallas_src>

<mosaic_0001>
module attributes {stable_mosaic.version = 11 : i64} {
  func.func @hetnet_kernel(%arg0: i32, %arg1: memref<384x64xf32, #tpu.memory_space<vmem>>, %arg2: memref<64x128xbf16, #tpu.memory_space<vmem>>, %arg3: memref<1x128xf32, #tpu.memory_space<vmem>>, %arg4: memref<1x128xf32, #tpu.memory_space<vmem>>, %arg5: memref<1x128xf32, #tpu.memory_space<vmem>>, %arg6: memref<128x256xbf16, #tpu.memory_space<vmem>>, %arg7: memref<1x256xf32, #tpu.memory_space<vmem>>, %arg8: memref<8x128xbf16, #tpu.memory_space<vmem>>, %arg9: memref<1x1xf32, #tpu.memory_space<smem>>, %arg10: memref<1x1x384xf32, #tpu.memory_space<vmem>>, %arg11: memref<384x128xf32, #tpu.memory_space<vmem>>) attributes {dimension_semantics = [#tpu.dimension_semantics<parallel>], iteration_bounds = array<i64: 2>, scalar_prefetch = 0 : i64, scratch_operands = 0 : i64, tpu.core_type = #tpu.core_type<tc>, window_params = [{transform_indices = @transform_0, window_bounds = array<i64: 384, 64>}, {pipeline_mode = #tpu.pipeline_mode<synchronous>, transform_indices = @transform_1, window_bounds = array<i64: 64, 128>}, {pipeline_mode = #tpu.pipeline_mode<synchronous>, transform_indices = @transform_2, window_bounds = array<i64: 1, 128>}, {pipeline_mode = #tpu.pipeline_mode<synchronous>, transform_indices = @transform_3, window_bounds = array<i64: 1, 128>}, {pipeline_mode = #tpu.pipeline_mode<synchronous>, transform_indices = @transform_4, window_bounds = array<i64: 1, 128>}, {pipeline_mode = #tpu.pipeline_mode<synchronous>, transform_indices = @transform_5, window_bounds = array<i64: 128, 256>}, {pipeline_mode = #tpu.pipeline_mode<synchronous>, transform_indices = @transform_6, window_bounds = array<i64: 1, 256>}, {pipeline_mode = #tpu.pipeline_mode<synchronous>, transform_indices = @transform_7, window_bounds = array<i64: 8, 128>}, {transform_indices = @transform_8, window_bounds = array<i64: 1, 1>}, {transform_indices = @transform_9, window_bounds = array<i64: 1, 1, 384>}, {transform_indices = @transform_10, window_bounds = array<i64: 384, 128>}]} {
    %c0 = arith.constant 0 : index
    %c0_0 = arith.constant 0 : index
    %0 = vector.load %arg1[%c0, %c0_0] : memref<384x64xf32, #tpu.memory_space<vmem>>, vector<384x64xf32>
    %1 = arith.truncf %0 : vector<384x64xf32> to vector<384x64xbf16>
    %c0_1 = arith.constant 0 : index
    %c0_2 = arith.constant 0 : index
    %2 = vector.load %arg2[%c0_1, %c0_2] : memref<64x128xbf16, #tpu.memory_space<vmem>>, vector<64x128xbf16>
    %cst = arith.constant dense<0.000000e+00> : vector<384x128xf32>
    %3 = tpu.matmul %1, %2, %cst {dimension_numbers = #tpu.dot_dimension_numbers<[1], [0], [0], [1], [0, 0, 1, 1], [], []>} : vector<384x64xbf16>, vector<64x128xbf16>, vector<384x128xf32> -> vector<384x128xf32>
    %c0_3 = arith.constant 0 : index
    %c0_4 = arith.constant 0 : index
    %4 = vector.load %arg3[%c0_3, %c0_4] : memref<1x128xf32, #tpu.memory_space<vmem>>, vector<1x128xf32>
    %5 = vector.broadcast %4 : vector<1x128xf32> to vector<384x128xf32>
    %6 = arith.addf %3, %5 : vector<384x128xf32>
    %cst_5 = arith.constant dense<0.000000e+00> : vector<384xf32>
    %7 = vector.multi_reduction <add>, %6, %cst_5 [1] : vector<384x128xf32> to vector<384xf32>
    %8 = vector.shape_cast %7 : vector<384xf32> to vector<384x1xf32>
    %9 = arith.mulf %6, %6 : vector<384x128xf32>
    %cst_6 = arith.constant dense<0.000000e+00> : vector<384xf32>
    %10 = vector.multi_reduction <add>, %9, %cst_6 [1] : vector<384x128xf32> to vector<384xf32>
    %11 = vector.shape_cast %10 : vector<384xf32> to vector<384x1xf32>
    %cst_7 = arith.constant 7.812500e-03 : f32
    %12 = vector.broadcast %cst_7 : f32 to vector<384x1xf32>
    %13 = arith.mulf %8, %12 : vector<384x1xf32>
    %cst_8 = arith.constant 7.812500e-03 : f32
    %14 = vector.broadcast %cst_8 : f32 to vector<384x1xf32>
    %15 = arith.mulf %11, %14 : vector<384x1xf32>
    %16 = arith.mulf %13, %13 : vector<384x1xf32>
    %17 = arith.subf %15, %16 : vector<384x1xf32>
    %cst_9 = arith.constant 0.000000e+00 : f32
    %18 = vector.broadcast %cst_9 : f32 to vector<384x1xf32>
    %19 = arith.maximumf %17, %18 : vector<384x1xf32>
    %20 = vector.broadcast %13 : vector<384x1xf32> to vector<384x128xf32>
    %21 = arith.subf %6, %20 : vector<384x128xf32>
    %cst_10 = arith.constant 9.99999974E-6 : f32
    %22 = vector.broadcast %cst_10 : f32 to vector<384x1xf32>
    %23 = arith.addf %19, %22 : vector<384x1xf32>
    %24 = math.rsqrt %23 : vector<384x1xf32>
    %25 = vector.broadcast %24 : vector<384x1xf32> to vector<384x128xf32>
    %26 = arith.mulf %21, %25 : vector<384x128xf32>
    %c0_11 = arith.constant 0 : index
    %c0_12 = arith.constant 0 : index
    %27 = vector.load %arg4[%c0_11, %c0_12] : memref<1x128xf32, #tpu.memory_space<vmem>>, vector<1x128xf32>
    %28 = vector.broadcast %27 : vector<1x128xf32> to vector<384x128xf32>
    %29 = arith.mulf %26, %28 : vector<384x128xf32>
    %c0_13 = arith.constant 0 : index
    %c0_14 = arith.constant 0 : index
    %30 = vector.load %arg5[%c0_13, %c0_14] : memref<1x128xf32, #tpu.memory_space<vmem>>, vector<1x128xf32>
    %31 = vector.broadcast %30 : vector<1x128xf32> to vector<384x128xf32>
    %32 = arith.addf %29, %31 : vector<384x128xf32>
    %cst_15 = arith.constant 0.000000e+00 : f32
    %33 = vector.broadcast %cst_15 : f32 to vector<384x128xf32>
    %34 = arith.maximumf %32, %33 : vector<384x128xf32>
    %35 = arith.truncf %34 : vector<384x128xf32> to vector<384x128xbf16>
    %c0_16 = arith.constant 0 : index
    %c0_17 = arith.constant 0 : index
    %36 = vector.load %arg6[%c0_16, %c0_17] : memref<128x256xbf16, #tpu.memory_space<vmem>>, vector<128x256xbf16>
    %cst_18 = arith.constant dense<0.000000e+00> : vector<384x256xf32>
    %37 = tpu.matmul %35, %36, %cst_18 {dimension_numbers = #tpu.dot_dimension_numbers<[1], [0], [0], [1], [0, 0, 1, 1], [], []>} : vector<384x128xbf16>, vector<128x256xbf16>, vector<384x256xf32> -> vector<384x256xf32>
    %c0_19 = arith.constant 0 : index
    %c0_20 = arith.constant 0 : index
    %38 = vector.load %arg7[%c0_19, %c0_20] : memref<1x256xf32, #tpu.memory_space<vmem>>, vector<1x256xf32>
    %39 = vector.broadcast %38 : vector<1x256xf32> to vector<384x256xf32>
    %40 = arith.addf %37, %39 : vector<384x256xf32>
    %41 = vector.extract_strided_slice %40 {offsets = [0, 0], sizes = [384, 128], strides = [1, 1]} : vector<384x256xf32> to vector<384x128xf32>
    %c0_21 = arith.constant 0 : index
    %c0_22 = arith.constant 0 : index
    %42 = vector.load %arg11[%c0_21, %c0_22] : memref<384x128xf32, #tpu.memory_space<vmem>>, vector<384x128xf32>
    tpu.vector_store %arg11[%c0_21, %c0_22], %41 {strides = array<i32>} : memref<384x128xf32, #tpu.memory_space<vmem>>, vector<384x128xf32>,
    %43 = vector.extract_strided_slice %40 {offsets = [0, 128], sizes = [384, 128], strides = [1, 1]} : vector<384x256xf32> to vector<384x128xf32>
    %cst_23 = arith.constant 0.000000e+00 : f32
    %44 = vector.broadcast %cst_23 : f32 to vector<384x128xf32>
    %45 = arith.maximumf %43, %44 : vector<384x128xf32>
    %46 = arith.truncf %45 : vector<384x128xf32> to vector<384x128xbf16>
    %c0_24 = arith.constant 0 : index
    %c0_25 = arith.constant 0 : index
    %47 = vector.load %arg8[%c0_24, %c0_25] : memref<8x128xbf16, #tpu.memory_space<vmem>>, vector<8x128xbf16>
    %cst_26 = arith.constant dense<0.000000e+00> : vector<8x384xf32>
    %48 = tpu.matmul %47, %46, %cst_26 {dimension_numbers = #tpu.dot_dimension_numbers<[1], [1], [0], [0], [0, 0, 1, 0], [], []>} : vector<8x128xbf16>, vector<384x128xbf16>, vector<8x384xf32> -> vector<8x384xf32>
    %49 = vector.extract_strided_slice %48 {offsets = [0, 0], sizes = [1, 384], strides = [1, 1]} : vector<8x384xf32> to vector<1x384xf32>
    %c0_27 = arith.constant 0 : index
    %c0_28 = arith.constant 0 : index
    %50 = memref.load %arg9[%c0_27, %c0_28] : memref<1x1xf32, #tpu.memory_space<smem>>
    %51 = vector.broadcast %50 : f32 to vector<1x384xf32>
    %52 = arith.addf %49, %51 : vector<1x384xf32>
    %c0_29 = arith.constant 0 : index
    %c0_30 = arith.constant 0 : index
    %c0_31 = arith.constant 0 : index
    %53 = vector.load %arg10[%c0_29, %c0_30, %c0_31] : memref<1x1x384xf32, #tpu.memory_space<vmem>>, vector<1x1x384xf32>
    %54 = vector.shape_cast %53 : vector<1x1x384xf32> to vector<1x384xf32>
    %55 = vector.shape_cast %52 : vector<1x384xf32> to vector<1x1x384xf32>
    tpu.vector_store %arg10[%c0_29, %c0_30, %c0_31], %55 {strides = array<i32>} : memref<1x1x384xf32, #tpu.memory_space<vmem>>, vector<1x1x384xf32>,
    return
  }
  func.func @transform_0(%arg0: i32) -> (i32, i32) {
    %c0_i32 = arith.constant 0 : i32
    %c0_i32_0 = arith.constant 0 : i32
    return %arg0, %c0_i32 : i32, i32
  }
  func.func @transform_1(%arg0: i32) -> (i32, i32) {
    %c0_i32 = arith.constant 0 : i32
    %c0_i32_0 = arith.constant 0 : i32
    %c0_i32_1 = arith.constant 0 : i32
    return %c0_i32, %c0_i32_0 : i32, i32
  }
  func.func @transform_2(%arg0: i32) -> (i32, i32) {
    %c0_i32 = arith.constant 0 : i32
    %c0_i32_0 = arith.constant 0 : i32
    %c0_i32_1 = arith.constant 0 : i32
    return %c0_i32, %c0_i32_0 : i32, i32
  }
  func.func @transform_3(%arg0: i32) -> (i32, i32) {
    %c0_i32 = arith.constant 0 : i32
    %c0_i32_0 = arith.constant 0 : i32
    %c0_i32_1 = arith.constant 0 : i32
    return %c0_i32, %c0_i32_0 : i32, i32
  }
  func.func @transform_4(%arg0: i32) -> (i32, i32) {
    %c0_i32 = arith.constant 0 : i32
    %c0_i32_0 = arith.constant 0 : i32
    %c0_i32_1 = arith.constant 0 : i32
    return %c0_i32, %c0_i32_0 : i32, i32
  }
  func.func @transform_5(%arg0: i32) -> (i32, i32) {
    %c0_i32 = arith.constant 0 : i32
    %c0_i32_0 = arith.constant 0 : i32
    %c0_i32_1 = arith.constant 0 : i32
    return %c0_i32, %c0_i32_0 : i32, i32
  }
  func.func @transform_6(%arg0: i32) -> (i32, i32) {
    %c0_i32 = arith.constant 0 : i32
    %c0_i32_0 = arith.constant 0 : i32
    %c0_i32_1 = arith.constant 0 : i32
    return %c0_i32, %c0_i32_0 : i32, i32
  }
  func.func @transform_7(%arg0: i32) -> (i32, i32) {
    %c0_i32 = arith.constant 0 : i32
    %c0_i32_0 = arith.constant 0 : i32
    %c0_i32_1 = arith.constant 0 : i32
    return %c0_i32, %c0_i32_0 : i32, i32
  }
  func.func @transform_8(%arg0: i32) -> (i32, i32) {
    %c0_i32 = arith.constant 0 : i32
    %c0_i32_0 = arith.constant 0 : i32
    %c0_i32_1 = arith.constant 0 : i32
    return %c0_i32, %c0_i32_0 : i32, i32
  }
  func.func @transform_9(%arg0: i32) -> (i32, i32, i32) {
    %c0_i32 = arith.constant 0 : i32
    %c0_i32_0 = arith.constant 0 : i32
    %c0_i32_1 = arith.constant 0 : i32
    return %arg0, %c0_i32, %c0_i32_0 : i32, i32, i32
  }
  func.func @transform_10(%arg0: i32) -> (i32, i32) {
    %c0_i32 = arith.constant 0 : i32
    %c0_i32_0 = arith.constant 0 : i32
    return %arg0, %c0_i32 : i32, i32
  }
}

</mosaic_0001>

<llo_original>
// kernel: hetnet_forward.1
$region0: #{hetnet_forward.1}
  #allocation0 [shape = 'u32[]', space=smem, size = 0x4, offset = 0x4, fixed_abs, tag = 'smem constant byte address 0x4 - core index']
  #allocation1 [shape = 'u32[72,128]{1,0:T(1,128)}', space=vmem, size = 0x9000, scoped, tag = 'internal scratch']
  #allocation2 [shape = 'f32[1,1]{1,0:T(1,128)S(6)}', space=smem, size = 0x200, scoped, tag = 'scoped memory for hetnet_forward.1']
  %s0 = inlined_call_operand.vmem [shape: f32[600,64], index: 0, kind: input, shape index: {}]
  %s1 = inlined_call_operand.vmem [shape: bf16[64,128], index: 1, kind: input, shape index: {}]
  %s2 = inlined_call_operand.vmem [shape: f32[1,128], index: 2, kind: input, shape index: {}]
  %s3 = inlined_call_operand.vmem [shape: f32[1,128], index: 3, kind: input, shape index: {}]
  %s4 = inlined_call_operand.vmem [shape: f32[1,128], index: 4, kind: input, shape index: {}]
  %s5 = inlined_call_operand.vmem [shape: bf16[128,256], index: 5, kind: input, shape index: {}]
  %s6 = inlined_call_operand.vmem [shape: f32[1,256], index: 6, kind: input, shape index: {}]
  %s7 = inlined_call_operand.vmem [shape: bf16[8,128], index: 7, kind: input, shape index: {}]
  %s8 = inlined_call_operand.<no memory space> [shape: f32[1,1], index: 8, kind: input, shape index: {}]
  %s9 = inlined_call_operand.vmem [shape: f32[2,1,384], index: 9, kind: output, shape index: {0}]
  %s10 = inlined_call_operand.hbm [shape: f32[600,128], index: 10, kind: output, shape index: {1}]
  %11 = xla_tuple %s9, %s10
  %s12 = sld [smem:[#allocation0]]
  $region77: #{hetnet_forward.1} parent=0
    _
  %s14 = ssub.s32 1, %s12
  %s15 = scalar_select 0, %s14, %s12
  %16 = sst [smem:[#allocation2]] %s8
  $region1: #{hetnet_forward.1} parent=0
    #allocation3 [shape = 'u8[393216]{0}', space=vmem, size = 0x60000, scoped, tag = 'output window, operand 1']
    #allocation4 [shape = 's32[2]{0}', space=sflag, size = 0x8, scoped, tag = 'scoped memory for hetnet_forward.1']
    %17 = vsyncpa [#allocation4], 0
    %s18 = scalar_lea.sflag [#allocation4], 1
    %19 = vsyncpa %s18, 0
    loop: start=0, step=1, limit=4
    $region2: #{hetnet_forward.1} parent=1 // loop_pre_header
      _
    $region3: #{hetnet_forward.1} parent=1 // loop_header
      %s21 = sphi 0, %s25
      %p22 = scmp.ge.s32.totalorder %s21, 4
      %s31 = sphi 0, %s33
      %s34 = sphi 0, %s31
      %s35 = sphi 0, %s34
      %s51 = sphi 0, %s35
      %s55 = sphi 0, %s55
      %s57 = sphi 0, %s55
      %s58 = sphi 0, %s57
      %s72 = sphi 0, %s58
      %s76 = sphi 0, %s76
      %s78 = sphi 0, %s76
      %s79 = sphi 0, %s78
      %s93 = sphi 0, %s79
      %s97 = sphi 0, %s97
      %s99 = sphi 0, %s97
      %s100 = sphi 0, %s99
      %s114 = sphi 0, %s100
      %s118 = sphi 0, %s118
      %s120 = sphi 0, %s118
      %s121 = sphi 0, %s120
      %s135 = sphi 0, %s121
      %s139 = sphi 0, %s139
      %s141 = sphi 0, %s139
      %s142 = sphi 0, %s141
      %s156 = sphi 0, %s142
      %s160 = sphi 0, %s160
      %s162 = sphi 0, %s160
      %s163 = sphi 0, %s162
      %s177 = sphi 0, %s163
      %s181 = sphi 0, %s181
      %s183 = sphi 0, %s181
      %s184 = sphi 0, %s183
      %s198 = sphi 0, %s184
      %s202 = sphi 0, %s202
      %s204 = sphi 0, %s202
      %s205 = sphi 0, %s204
      %s219 = sphi 0, %s205
      %s225 = sphi 0, %s227
      %s228 = sphi 0, %s225
      %s229 = sphi 0, %s228
      %s245 = sphi 0, %s229
      %s251 = sphi 0, %s253
      %s254 = sphi 0, %s251
      %s255 = sphi 0, %s254
      %s271 = sphi 0, %s255
    $region4: #{hetnet_forward.1} parent=1 // loop_header_branch
      %24 = sbr.rel (%p22) target = $region8
    $region5: #{hetnet_forward.1} parent=1 // loop_body
      %s26 = ssub.s32 %s21, 1
      %s27 = ssub.s32 %s21, 2
      %s28 = sadd.s32 %s21, 1
      %s29 = ssub.s32 %s21, %s28
      %p30 = scmp.eq.s32.totalorder %s29, 0
      %s32 = sadd.s32 %s31, 1
      %s33 = scalar_select %p30, %s31, %s32
      %p36 = pneg %p30
      %p37 = scmp.eq.s32.totalorder %s21, 1
      %p38 = por %p36, %p37
      %p39 = scmp.ne.s32.totalorder %s31, %s34
      %p40 = scmp.eq.s32.totalorder %s21, 0
      %p41 = por %p39, %p40
      %p42 = scmp.ne.s32.totalorder %s31, %s34
      %p43 = scmp.eq.s32.totalorder %s26, 1
      %p44 = por %p42, %p43
      %p45 = scmp.ne.s32.totalorder %s34, %s35
      %p46 = scmp.eq.s32.totalorder %s26, 0
      %p47 = por %p45, %p46
      %p48 = scmp.ne.s32.totalorder %s34, %s35
      %p49 = scmp.eq.s32.totalorder %s27, 1
      %p50 = por %p48, %p49
      %p52 = scmp.ne.s32.totalorder %s35, %s51
      %p53 = scmp.eq.s32.totalorder %s27, 0
      %p54 = por %p52, %p53
      %s56 = sadd.s32 %s55, 1
      %p59 = scmp.eq.s32.totalorder %s21, 1
      %p60 = scmp.ne.s32.totalorder %s55, %s57
      %p61 = scmp.eq.s32.totalorder %s21, 0
      %p62 = por %p60, %p61
      %p63 = scmp.ne.s32.totalorder %s55, %s57
      %p64 = scmp.eq.s32.totalorder %s26, 1
      %p65 = por %p63, %p64
      %p66 = scmp.ne.s32.totalorder %s57, %s58
      %p67 = scmp.eq.s32.totalorder %s26, 0
      %p68 = por %p66, %p67
      %p69 = scmp.ne.s32.totalorder %s57, %s58
      %p70 = scmp.eq.s32.totalorder %s27, 1
      %p71 = por %p69, %p70
      %p73 = scmp.ne.s32.totalorder %s58, %s72
      %p74 = scmp.eq.s32.totalorder %s27, 0
      %p75 = por %p73, %p74
      %s77 = sadd.s32 %s76, 1
      %p80 = scmp.eq.s32.totalorder %s21, 1
      %p81 = scmp.ne.s32.totalorder %s76, %s78
      %p82 = scmp.eq.s32.totalorder %s21, 0
      %p83 = por %p81, %p82
      %p84 = scmp.ne.s32.totalorder %s76, %s78
      %p85 = scmp.eq.s32.totalorder %s26, 1
      %p86 = por %p84, %p85
      %p87 = scmp.ne.s32.totalorder %s78, %s79
      %p88 = scmp.eq.s32.totalorder %s26, 0
      %p89 = por %p87, %p88
      %p90 = scmp.ne.s32.totalorder %s78, %s79
      %p91 = scmp.eq.s32.totalorder %s27, 1
      %p92 = por %p90, %p91
      %p94 = scmp.ne.s32.totalorder %s79, %s93
      %p95 = scmp.eq.s32.totalorder %s27, 0
      %p96 = por %p94, %p95
      %s98 = sadd.s32 %s97, 1
      %p101 = scmp.eq.s32.totalorder %s21, 1
      %p102 = scmp.ne.s32.totalorder %s97, %s99
      %p103 = scmp.eq.s32.totalorder %s21, 0
      %p104 = por %p102, %p103
      %p105 = scmp.ne.s32.totalorder %s97, %s99
      %p106 = scmp.eq.s32.totalorder %s26, 1
      %p107 = por %p105, %p106
      %p108 = scmp.ne.s32.totalorder %s99, %s100
      %p109 = scmp.eq.s32.totalorder %s26, 0
      %p110 = por %p108, %p109
      %p111 = scmp.ne.s32.totalorder %s99, %s100
      %p112 = scmp.eq.s32.totalorder %s27, 1
      %p113 = por %p111, %p112
      %p115 = scmp.ne.s32.totalorder %s100, %s114
      %p116 = scmp.eq.s32.totalorder %s27, 0
      %p117 = por %p115, %p116
      %s119 = sadd.s32 %s118, 1
      %p122 = scmp.eq.s32.totalorder %s21, 1
      %p123 = scmp.ne.s32.totalorder %s118, %s120
      %p124 = scmp.eq.s32.totalorder %s21, 0
      %p125 = por %p123, %p124
      %p126 = scmp.ne.s32.totalorder %s118, %s120
      %p127 = scmp.eq.s32.totalorder %s26, 1
      %p128 = por %p126, %p127
      %p129 = scmp.ne.s32.totalorder %s120, %s121
      %p130 = scmp.eq.s32.totalorder %s26, 0
      %p131 = por %p129, %p130
      %p132 = scmp.ne.s32.totalorder %s120, %s121
      %p133 = scmp.eq.s32.totalorder %s27, 1
      %p134 = por %p132, %p133
      %p136 = scmp.ne.s32.totalorder %s121, %s135
      %p137 = scmp.eq.s32.totalorder %s27, 0
      %p138 = por %p136, %p137
      %s140 = sadd.s32 %s139, 1
      %p143 = scmp.eq.s32.totalorder %s21, 1
      %p144 = scmp.ne.s32.totalorder %s139, %s141
      %p145 = scmp.eq.s32.totalorder %s21, 0
      %p146 = por %p144, %p145
      %p147 = scmp.ne.s32.totalorder %s139, %s141
      %p148 = scmp.eq.s32.totalorder %s26, 1
      %p149 = por %p147, %p148
      %p150 = scmp.ne.s32.totalorder %s141, %s142
      %p151 = scmp.eq.s32.totalorder %s26, 0
      %p152 = por %p150, %p151
      %p153 = scmp.ne.s32.totalorder %s141, %s142
      %p154 = scmp.eq.s32.totalorder %s27, 1
      %p155 = por %p153, %p154
      %p157 = scmp.ne.s32.totalorder %s142, %s156
      %p158 = scmp.eq.s32.totalorder %s27, 0
      %p159 = por %p157, %p158
      %s161 = sadd.s32 %s160, 1
      %p164 = scmp.eq.s32.totalorder %s21, 1
      %p165 = scmp.ne.s32.totalorder %s160, %s162
      %p166 = scmp.eq.s32.totalorder %s21, 0
      %p167 = por %p165, %p166
      %p168 = scmp.ne.s32.totalorder %s160, %s162
      %p169 = scmp.eq.s32.totalorder %s26, 1
      %p170 = por %p168, %p169
      %p171 = scmp.ne.s32.totalorder %s162, %s163
      %p172 = scmp.eq.s32.totalorder %s26, 0
      %p173 = por %p171, %p172
      %p174 = scmp.ne.s32.totalorder %s162, %s163
      %p175 = scmp.eq.s32.totalorder %s27, 1
      %p176 = por %p174, %p175
      %p178 = scmp.ne.s32.totalorder %s163, %s177
      %p179 = scmp.eq.s32.totalorder %s27, 0
      %p180 = por %p178, %p179
      %s182 = sadd.s32 %s181, 1
      %p185 = scmp.eq.s32.totalorder %s21, 1
      %p186 = scmp.ne.s32.totalorder %s181, %s183
      %p187 = scmp.eq.s32.totalorder %s21, 0
      %p188 = por %p186, %p187
      %p189 = scmp.ne.s32.totalorder %s181, %s183
      %p190 = scmp.eq.s32.totalorder %s26, 1
      %p191 = por %p189, %p190
      %p192 = scmp.ne.s32.totalorder %s183, %s184
      %p193 = scmp.eq.s32.totalorder %s26, 0
      %p194 = por %p192, %p193
      %p195 = scmp.ne.s32.totalorder %s183, %s184
      %p196 = scmp.eq.s32.totalorder %s27, 1
      %p197 = por %p195, %p196
      %p199 = scmp.ne.s32.totalorder %s184, %s198
      %p200 = scmp.eq.s32.totalorder %s27, 0
      %p201 = por %p199, %p200
      %s203 = sadd.s32 %s202, 1
      %p206 = scmp.eq.s32.totalorder %s21, 1
      %p207 = scmp.ne.s32.totalorder %s202, %s204
      %p208 = scmp.eq.s32.totalorder %s21, 0
      %p209 = por %p207, %p208
      %p210 = scmp.ne.s32.totalorder %s202, %s204
      %p211 = scmp.eq.s32.totalorder %s26, 1
      %p212 = por %p210, %p211
      %p213 = scmp.ne.s32.totalorder %s204, %s205
      %p214 = scmp.eq.s32.totalorder %s26, 0
      %p215 = por %p213, %p214
      %p216 = scmp.ne.s32.totalorder %s204, %s205
      %p217 = scmp.eq.s32.totalorder %s27, 1
      %p218 = por %p216, %p217
      %p220 = scmp.ne.s32.totalorder %s205, %s219
      %p221 = scmp.eq.s32.totalorder %s27, 0
      %p222 = por %p220, %p221
      %s223 = ssub.s32 %s21, %s28
      %p224 = scmp.eq.s32.totalorder %s223, 0
      %s226 = sadd.s32 %s225, 1
      %s227 = scalar_select %p224, %s225, %s226
      %p230 = pneg %p224
      %p231 = scmp.eq.s32.totalorder %s21, 1
      %p232 = por %p230, %p231
      %p233 = scmp.ne.s32.totalorder %s225, %s228
      %p234 = scmp.eq.s32.totalorder %s21, 0
      %p235 = por %p233, %p234
      %p236 = scmp.ne.s32.totalorder %s225, %s228
      %p237 = scmp.eq.s32.totalorder %s26, 1
      %p238 = por %p236, %p237
      %p239 = scmp.ne.s32.totalorder %s228, %s229
      %p240 = scmp.eq.s32.totalorder %s26, 0
      %p241 = por %p239, %p240
      %p242 = scmp.ne.s32.totalorder %s228, %s229
      %p243 = scmp.eq.s32.totalorder %s27, 1
      %p244 = por %p242, %p243
      %p246 = scmp.ne.s32.totalorder %s229, %s245
      %p247 = scmp.eq.s32.totalorder %s27, 0
      %p248 = por %p246, %p247
      %s249 = ssub.s32 %s21, %s28
      %p250 = scmp.eq.s32.totalorder %s249, 0
      %s252 = sadd.s32 %s251, 1
      %s253 = scalar_select %p250, %s251, %s252
      %p256 = pneg %p250
      %p257 = scmp.eq.s32.totalorder %s21, 1
      %p258 = por %p256, %p257
      %p259 = scmp.ne.s32.totalorder %s251, %s254
      %p260 = scmp.eq.s32.totalorder %s21, 0
      %p261 = por %p259, %p260
      %p262 = scmp.ne.s32.totalorder %s251, %s254
      %p263 = scmp.eq.s32.totalorder %s26, 1
      %p264 = por %p262, %p263
      %p265 = scmp.ne.s32.totalorder %s254, %s255
      %p266 = scmp.eq.s32.totalorder %s26, 0
      %p267 = por %p265, %p266
      %p268 = scmp.ne.s32.totalorder %s254, %s255
      %p269 = scmp.eq.s32.totalorder %s27, 1
      %p270 = por %p268, %p269
      %p272 = scmp.ne.s32.totalorder %s255, %s271
      %p273 = scmp.eq.s32.totalorder %s27, 0
      %p274 = por %p272, %p273
      %p275 = scmp.le.s32.totalorder 1, %s21
      %p276 = scmp.lt.s32.totalorder %s21, 3
      %p277 = pnand %p275, %p276
      %p278 = pneg %p277
      // Predicated region
      $region9: #{hetnet_forward.1} parent=5 // pred_check
        _
      $region10: #{hetnet_forward.1} parent=5 // pred_check_branch
        %280 = sbr.rel (%p277) target = $region12
      $region11: #{hetnet_forward.1} parent=5 // pred_region
        %s281 = ssub.s32 %s21, 1
        // Predicated region
        $region13: #{hetnet_forward.1} parent=11 // pred_check
          %p282 = pneg %p68
        $region14: #{hetnet_forward.1} parent=11 // pred_check_branch
          %284 = sbr.rel (%p282) target = $region16
        $region15: #{hetnet_forward.1} parent=11 // pred_region
          _
        $region16: #{hetnet_forward.1} parent=11 // pred_fallthru
          _
        // Predicated region
        $region17: #{hetnet_forward.1} parent=11 // pred_check
          %p285 = pneg %p89
        $region18: #{hetnet_forward.1} parent=11 // pred_check_branch
          %287 = sbr.rel (%p285) target = $region20
        $region19: #{hetnet_forward.1} parent=11 // pred_region
          _
        $region20: #{hetnet_forward.1} parent=11 // pred_fallthru
          _
        // Predicated region
        $region21: #{hetnet_forward.1} parent=11 // pred_check
          %p288 = pneg %p110
        $region22: #{hetnet_forward.1} parent=11 // pred_check_branch
          %290 = sbr.rel (%p288) target = $region24
        $region23: #{hetnet_forward.1} parent=11 // pred_region
          _
        $region24: #{hetnet_forward.1} parent=11 // pred_fallthru
          _
        // Predicated region
        $region25: #{hetnet_forward.1} parent=11 // pred_check
          %p291 = pneg %p131
        $region26: #{hetnet_forward.1} parent=11 // pred_check_branch
          %293 = sbr.rel (%p291) target = $region28
        $region27: #{hetnet_forward.1} parent=11 // pred_region
          _
        $region28: #{hetnet_forward.1} parent=11 // pred_fallthru
          _
        // Predicated region
        $region29: #{hetnet_forward.1} parent=11 // pred_check
          %p294 = pneg %p152
        $region30: #{hetnet_forward.1} parent=11 // pred_check_branch
          %296 = sbr.rel (%p294) target = $region32
        $region31: #{hetnet_forward.1} parent=11 // pred_region
          _
        $region32: #{hetnet_forward.1} parent=11 // pred_fallthru
          _
        // Predicated region
        $region33: #{hetnet_forward.1} parent=11 // pred_check
          %p297 = pneg %p173
        $region34: #{hetnet_forward.1} parent=11 // pred_check_branch
          %299 = sbr.rel (%p297) target = $region36
        $region35: #{hetnet_forward.1} parent=11 // pred_region
          _
        $region36: #{hetnet_forward.1} parent=11 // pred_fallthru
          _
        // Predicated region
        $region37: #{hetnet_forward.1} parent=11 // pred_check
          %p300 = pneg %p194
        $region38: #{hetnet_forward.1} parent=11 // pred_check_branch
          %302 = sbr.rel (%p300) target = $region40
        $region39: #{hetnet_forward.1} parent=11 // pred_region
          _
        $region40: #{hetnet_forward.1} parent=11 // pred_fallthru
          _
        // Predicated region
        $region41: #{hetnet_forward.1} parent=11 // pred_check
          %p303 = pneg %p215
        $region42: #{hetnet_forward.1} parent=11 // pred_check_branch
          %305 = sbr.rel (%p303) target = $region44
        $region43: #{hetnet_forward.1} parent=11 // pred_region
          _
        $region44: #{hetnet_forward.1} parent=11 // pred_fallthru
          _
      $region12: #{hetnet_forward.1} parent=5 // pred_fallthru
        _
      %p306 = scmp.lt.s32.totalorder %s21, 2
      // Predicated region
      $region45: #{hetnet_forward.1} parent=5 // pred_check
        %p307 = pneg %p306
      $region46: #{hetnet_forward.1} parent=5 // pred_check_branch
        %309 = sbr.rel (%p307) target = $region48
      $region47: #{hetnet_forward.1} parent=5 // pred_region
        // Predicated region
        $region49: #{hetnet_forward.1} parent=47 // pred_check
          %p310 = pneg %p41
        $region50: #{hetnet_forward.1} parent=47 // pred_check_branch
          %312 = sbr.rel (%p310) target = $region52
        $region51: #{hetnet_forward.1} parent=47 // pred_region
          %s313 = smul.u32 48, %s21
          %s314 = ssub.s32 75, %s313
          %p315 = scmp.lt.s32.totalorder %s314, 48
          %s316 = scalar_select %p315, %s314, 48
          %s317 = smul.u32 8, %s316
          %p318 = scmp.lt.s32.totalorder %s313, 74
          %s319 = scalar_select %p318, %s313, 74
          %s320 = smul.addr %s319, 8
          %s321 = scalar_lea.vmem %s0, %s320
          %s322 = smul.u32 48, %s21
          %s323 = ssub.s32 75, %s322
          %p324 = scmp.lt.s32.totalorder %s323, 48
          %s325 = scalar_select %p324, %s323, 48
          %s326 = smul.u32 8, %s325
        $region52: #{hetnet_forward.1} parent=47 // pred_fallthru
          _
      $region48: #{hetnet_forward.1} parent=5 // pred_fallthru
        _
      %p327 = scmp.le.s32.totalorder 1, %s21
      %p328 = scmp.lt.s32.totalorder %s21, 3
      %p329 = pnand %p327, %p328
      %p330 = pneg %p329
      // Predicated region
      $region53: #{hetnet_forward.1} parent=5 // pred_check
        _
      $region54: #{hetnet_forward.1} parent=5 // pred_check_branch
        %332 = sbr.rel (%p329) target = $region56
      $region55: #{hetnet_forward.1} parent=5 // pred_region
        %s333 = ssub.s32 %s21, 1
        %s334 = smul.u32 48, %s26
        %s335 = ssub.s32 75, %s334
        %p336 = scmp.lt.s32.totalorder %s335, 48
        %s337 = scalar_select %p336, %s335, 48
        %s338 = smul.u32 8, %s337
        %p339 = scmp.lt.s32.totalorder %s334, 74
        %s340 = scalar_select %p339, %s334, 74
        %s341 = smul.addr %s340, 8
        %s342 = scalar_lea.vmem %s0, %s341
        %p343 = pneg %p47
        %p344 = pneg %p44
        %p345 = pneg %p68
        %p346 = pneg %p65
        %p347 = pneg %p89
        %p348 = pneg %p86
        %p349 = pneg %p110
        %p350 = pneg %p107
        %p351 = pneg %p131
        %p352 = pneg %p128
        %p353 = pneg %p152
        %p354 = pneg %p149
        %p355 = pneg %p173
        %p356 = pneg %p170
        %p357 = pneg %p194
        %p358 = pneg %p191
        %p359 = pneg %p215
        %p360 = pneg %p212
        %p361 = pneg %p241
        %p362 = pneg %p238
        %p363 = scmp.lt.s32.totalorder %s26, 1
        %s364 = scalar_select %p363, %s26, 1
        %s365 = smul.addr %s364, 3
        %s366 = scalar_lea.vmem %s9, %s365
        %p367 = pneg %p267
        %p368 = pneg %p264
        %s369 = sand.u32 %s254, 1
        %s370 = scalar_lea.sflag [#allocation4], %s369
        %s371 = sand.u32 %s254, 1
        %s372 = smul.addr %s371, 384
        %s373 = scalar_lea.vmem [#allocation3], %s372
        %s374 = smul.u32 48, %s26
        %s375 = ssub.s32 75, %s374
        %p376 = scmp.lt.s32.totalorder %s375, 48
        %s377 = scalar_select %p376, %s375, 48
        %s378 = smul.u32 8, %s377
        %p379 = scmp.lt.s32.totalorder %s374, 74
        %s380 = scalar_select %p379, %s374, 74
        %s381 = smul.addr %s380, 8
        %s382 = scalar_lea.vmem %s0, %s381
        %s383 = smul.u32 48, %s26
        %s384 = ssub.s32 75, %s383
        %p385 = scmp.lt.s32.totalorder %s384, 48
        %s386 = scalar_select %p385, %s384, 48
        %s387 = smul.u32 8, %s386
        %p388 = scmp.lt.s32.totalorder %s26, 1
        %s389 = scalar_select %p388, %s26, 1
        %s390 = smul.addr %s389, 3
        %s391 = scalar_lea.vmem %s9, %s390
        %s392 = smul.u32 48, %s26
        %s393 = ssub.s32 75, %s392
        %p394 = scmp.lt.s32.totalorder %s393, 48
        %s395 = scalar_select %p394, %s393, 48
        %s396 = smul.u32 8, %s395
        %v398 = vld [vmem:[%s382] sm:$0xff]
        %v399 = vld [vmem:[%s382 + $0x8] sm:$0xff]
        %v400 = vld [vmem:[%s382 + $0x10] sm:$0xff]
        %v401 = vld [vmem:[%s382 + $0x18] sm:$0xff]
        %v402 = vld [vmem:[%s382 + $0x20] sm:$0xff]
        %v403 = vld [vmem:[%s382 + $0x28] sm:$0xff]
        %v404 = vld [vmem:[%s382 + $0x30] sm:$0xff]
        %v405 = vld [vmem:[%s382 + $0x38] sm:$0xff]
        %v406 = vld [vmem:[%s382 + $0x40] sm:$0xff]
        %v407 = vld [vmem:[%s382 + $0x48] sm:$0xff]
        %v408 = vld [vmem:[%s382 + $0x50] sm:$0xff]
        %v409 = vld [vmem:[%s382 + $0x58] sm:$0xff]
        %v410 = vld [vmem:[%s382 + $0x60] sm:$0xff]
        %v411 = vld [vmem:[%s382 + $0x68] sm:$0xff]
        %v412 = vld [vmem:[%s382 + $0x70] sm:$0xff]
        %v413 = vld [vmem:[%s382 + $0x78] sm:$0xff]
        %v414 = vld [vmem:[%s382 + $0x80] sm:$0xff]
        %v415 = vld [vmem:[%s382 + $0x88] sm:$0xff]
        %v416 = vld [vmem:[%s382 + $0x90] sm:$0xff]
        %v417 = vld [vmem:[%s382 + $0x98] sm:$0xff]
        %v418 = vld [vmem:[%s382 + $0xa0] sm:$0xff]
        %v419 = vld [vmem:[%s382 + $0xa8] sm:$0xff]
        %v420 = vld [vmem:[%s382 + $0xb0] sm:$0xff]
        %v421 = vld [vmem:[%s382 + $0xb8] sm:$0xff]
        %v422 = vld [vmem:[%s382 + $0xc0] sm:$0xff]
        %v423 = vld [vmem:[%s382 + $0xc8] sm:$0xff]
        %v424 = vld [vmem:[%s382 + $0xd0] sm:$0xff]
        %v425 = vld [vmem:[%s382 + $0xd8] sm:$0xff]
        %v426 = vld [vmem:[%s382 + $0xe0] sm:$0xff]
        %v427 = vld [vmem:[%s382 + $0xe8] sm:$0xff]
        %v428 = vld [vmem:[%s382 + $0xf0] sm:$0xff]
        %v429 = vld [vmem:[%s382 + $0xf8] sm:$0xff]
        %v430 = vld [vmem:[%s382 + $0x100] sm:$0xff]
        %v431 = vld [vmem:[%s382 + $0x108] sm:$0xff]
        %v432 = vld [vmem:[%s382 + $0x110] sm:$0xff]
        %v433 = vld [vmem:[%s382 + $0x118] sm:$0xff]
        %v434 = vld [vmem:[%s382 + $0x120] sm:$0xff]
        %v435 = vld [vmem:[%s382 + $0x128] sm:$0xff]
        %v436 = vld [vmem:[%s382 + $0x130] sm:$0xff]
        %v437 = vld [vmem:[%s382 + $0x138] sm:$0xff]
        %v438 = vld [vmem:[%s382 + $0x140] sm:$0xff]
        %v439 = vld [vmem:[%s382 + $0x148] sm:$0xff]
        %v440 = vld [vmem:[%s382 + $0x150] sm:$0xff]
        %v441 = vld [vmem:[%s382 + $0x158] sm:$0xff]
        %v442 = vld [vmem:[%s382 + $0x160] sm:$0xff]
        %v443 = vld [vmem:[%s382 + $0x168] sm:$0xff]
        %v444 = vld [vmem:[%s382 + $0x170] sm:$0xff]
        %v445 = vld [vmem:[%s382 + $0x178] sm:$0xff]
        %v446 = vpack.c.bf16 %v399, %v398
        %v447 = vpack.c.bf16 %v401, %v400
        %v448 = vpack.c.bf16 %v403, %v402
        %v449 = vpack.c.bf16 %v405, %v404
        %v450 = vpack.c.bf16 %v407, %v406
        %v451 = vpack.c.bf16 %v409, %v408
        %v452 = vpack.c.bf16 %v411, %v410
        %v453 = vpack.c.bf16 %v413, %v412
        %v454 = vpack.c.bf16 %v415, %v414
        %v455 = vpack.c.bf16 %v417, %v416
        %v456 = vpack.c.bf16 %v419, %v418
        %v457 = vpack.c.bf16 %v421, %v420
        %v458 = vpack.c.bf16 %v423, %v422
        %v459 = vpack.c.bf16 %v425, %v424
        %v460 = vpack.c.bf16 %v427, %v426
        %v461 = vpack.c.bf16 %v429, %v428
        %v462 = vpack.c.bf16 %v431, %v430
        %v463 = vpack.c.bf16 %v433, %v432
        %v464 = vpack.c.bf16 %v435, %v434
        %v465 = vpack.c.bf16 %v437, %v436
        %v466 = vpack.c.bf16 %v439, %v438
        %v467 = vpack.c.bf16 %v441, %v440
        %v468 = vpack.c.bf16 %v443, %v442
        %v469 = vpack.c.bf16 %v445, %v444
        %v470 = vld [vmem:[%s1] sm:$0xf]
        %v471 = vld [vmem:[%s1 + $0x4] sm:$0xf]
        %v472 = vld [vmem:[%s1 + $0x8] sm:$0xf]
        %v473 = vld [vmem:[%s1 + $0xc] sm:$0xf]
        %v474 = vld [vmem:[%s1 + $0x10] sm:$0xf]
        %v475 = vld [vmem:[%s1 + $0x14] sm:$0xf]
        %v476 = vld [vmem:[%s1 + $0x18] sm:$0xf]
        %v477 = vld [vmem:[%s1 + $0x1c] sm:$0xf]
        %v478 = vld [vmem:[%s2] sm:$0x1]
        %v480 = vperm.slane %v478, 0
        %v490 = vunpack.c.l.b16 %v470
        %v491 = vunpack.c.l.b16 %v471
        %v492 = vunpack.c.l.b16 %v472
        %v493 = vunpack.c.l.b16 %v473
        %v494 = vunpack.c.l.b16 %v474
        %v495 = vunpack.c.l.b16 %v475
        %v496 = vunpack.c.l.b16 %v476
        %v497 = vunpack.c.l.b16 %v477
        %v498 = vpack.c.b16 %v491, %v490
        %v499 = vpack.c.b16 %v493, %v492
        %v500 = vpack.c.b16 %v495, %v494
        %v501 = vpack.c.b16 %v497, %v496
        %vm506 = vcmask 523264
        %v508 = vsel %vm506, %v446, 0
        %v511 = vsel %vm506, %v447, 0
        %v514 = vsel %vm506, %v448, 0
        %v517 = vsel %vm506, %v449, 0
        %v520 = vsel %vm506, %v450, 0
        %v523 = vsel %vm506, %v451, 0
        %v526 = vsel %vm506, %v452, 0
        %v529 = vsel %vm506, %v453, 0
        %v532 = vsel %vm506, %v454, 0
        %v535 = vsel %vm506, %v455, 0
        %v538 = vsel %vm506, %v456, 0
        %v541 = vsel %vm506, %v457, 0
        %v544 = vsel %vm506, %v458, 0
        %v547 = vsel %vm506, %v459, 0
        %v550 = vsel %vm506, %v460, 0
        %v553 = vsel %vm506, %v461, 0
        %v556 = vsel %vm506, %v462, 0
        %v559 = vsel %vm506, %v463, 0
        %v562 = vsel %vm506, %v464, 0
        %v565 = vsel %vm506, %v465, 0
        %v568 = vsel %vm506, %v466, 0
        %v571 = vsel %vm506, %v467, 0
        %v574 = vsel %vm506, %v468, 0
        %v577 = vsel %vm506, %v469, 0
        %579 = vmatpush.bf16.msra.mxu0 0
        %580 = vmatpush.bf16.msra.mxu0 0
        %581 = vmatpush.bf16.msra.mxu0 0
        %582 = vmatpush.bf16.msra.mxu0 0
        %583 = vmatpush.bf16.msra.mxu0 %v501
        %584 = vmatpush.bf16.msra.mxu0 %v500
        %585 = vmatpush.bf16.msra.mxu0 %v499
        %586 = vmatpush.bf16.msra.mxu0 %v498
        %587 = vmatmul.bf16.gmra.mxu0 %v508
        %v588 = vpop.f32.mrf.mxu0
        %v589 = vadd.f32 %v480, %v588
        %v590 = vpop.f32.mrf.mxu0
        %v591 = vadd.f32 %v480, %v590
        %592 = vmatmul.bf16.gmra.mxu0 %v511
        %v593 = vpop.f32.mrf.mxu0
        %v594 = vadd.f32 %v480, %v593
        %v595 = vpop.f32.mrf.mxu0
        %v596 = vadd.f32 %v480, %v595
        %597 = vmatmul.bf16.gmra.mxu0 %v514
        %v598 = vpop.f32.mrf.mxu0
        %v599 = vadd.f32 %v480, %v598
        %v600 = vpop.f32.mrf.mxu0
        %v601 = vadd.f32 %v480, %v600
        %602 = vmatmul.bf16.gmra.mxu0 %v517
        %v603 = vpop.f32.mrf.mxu0
        %v604 = vadd.f32 %v480, %v603
        %v605 = vpop.f32.mrf.mxu0
        %v606 = vadd.f32 %v480, %v605
        %607 = vmatmul.bf16.gmra.mxu0 %v520
        %v608 = vpop.f32.mrf.mxu0
        %v609 = vadd.f32 %v480, %v608
        %v610 = vpop.f32.mrf.mxu0
        %v611 = vadd.f32 %v480, %v610
        %612 = vmatmul.bf16.gmra.mxu0 %v523
        %v613 = vpop.f32.mrf.mxu0
        %v614 = vadd.f32 %v480, %v613
        %v615 = vpop.f32.mrf.mxu0
        %v616 = vadd.f32 %v480, %v615
        %617 = vmatmul.bf16.gmra.mxu0 %v526
        %v618 = vpop.f32.mrf.mxu0
        %v619 = vadd.f32 %v480, %v618
        %v620 = vpop.f32.mrf.mxu0
        %v621 = vadd.f32 %v480, %v620
        %622 = vmatmul.bf16.gmra.mxu0 %v529
        %v623 = vpop.f32.mrf.mxu0
        %v624 = vadd.f32 %v480, %v623
        %v625 = vpop.f32.mrf.mxu0
        %v626 = vadd.f32 %v480, %v625
        %627 = vmatmul.bf16.gmra.mxu0 %v532
        %v628 = vpop.f32.mrf.mxu0
        %v629 = vadd.f32 %v480, %v628
        %v630 = vpop.f32.mrf.mxu0
        %v631 = vadd.f32 %v480, %v630
        %632 = vmatmul.bf16.gmra.mxu0 %v535
        %v633 = vpop.f32.mrf.mxu0
        %v634 = vadd.f32 %v480, %v633
        %v635 = vpop.f32.mrf.mxu0
        %v636 = vadd.f32 %v480, %v635
        %637 = vmatmul.bf16.gmra.mxu0 %v538
        %v638 = vpop.f32.mrf.mxu0
        %v639 = vadd.f32 %v480, %v638
        %v640 = vpop.f32.mrf.mxu0
        %v641 = vadd.f32 %v480, %v640
        %642 = vmatmul.bf16.gmra.mxu0 %v541
        %v643 = vpop.f32.mrf.mxu0
        %v644 = vadd.f32 %v480, %v643
        %v645 = vpop.f32.mrf.mxu0
        %v646 = vadd.f32 %v480, %v645
        %647 = vmatmul.bf16.gmra.mxu0 %v544
        %v648 = vpop.f32.mrf.mxu0
        %v649 = vadd.f32 %v480, %v648
        %v650 = vpop.f32.mrf.mxu0
        %v651 = vadd.f32 %v480, %v650
        %652 = vmatmul.bf16.gmra.mxu0 %v547
        %v653 = vpop.f32.mrf.mxu0
        %v654 = vadd.f32 %v480, %v653
        %v655 = vpop.f32.mrf.mxu0
        %v656 = vadd.f32 %v480, %v655
        %657 = vmatmul.bf16.gmra.mxu0 %v550
        %v658 = vpop.f32.mrf.mxu0
        %v659 = vadd.f32 %v480, %v658
        %v660 = vpop.f32.mrf.mxu0
        %v661 = vadd.f32 %v480, %v660
        %662 = vmatmul.bf16.gmra.mxu0 %v553
        %v663 = vpop.f32.mrf.mxu0
        %v664 = vadd.f32 %v480, %v663
        %v665 = vpop.f32.mrf.mxu0
        %v666 = vadd.f32 %v480, %v665
        %667 = vmatmul.bf16.gmra.mxu0 %v556
        %v668 = vpop.f32.mrf.mxu0
        %v669 = vadd.f32 %v480, %v668
        %v670 = vpop.f32.mrf.mxu0
        %v671 = vadd.f32 %v480, %v670
        %672 = vmatmul.bf16.gmra.mxu0 %v559
        %v673 = vpop.f32.mrf.mxu0
        %v674 = vadd.f32 %v480, %v673
        %v675 = vpop.f32.mrf.mxu0
        %v676 = vadd.f32 %v480, %v675
        %677 = vmatmul.bf16.gmra.mxu0 %v562
        %v678 = vpop.f32.mrf.mxu0
        %v679 = vadd.f32 %v480, %v678
        %v680 = vpop.f32.mrf.mxu0
        %v681 = vadd.f32 %v480, %v680
        %682 = vmatmul.bf16.gmra.mxu0 %v565
        %v683 = vpop.f32.mrf.mxu0
        %v684 = vadd.f32 %v480, %v683
        %v685 = vpop.f32.mrf.mxu0
        %v686 = vadd.f32 %v480, %v685
        %687 = vmatmul.bf16.gmra.mxu0 %v568
        %v688 = vpop.f32.mrf.mxu0
        %v689 = vadd.f32 %v480, %v688
        %v690 = vpop.f32.mrf.mxu0
        %v691 = vadd.f32 %v480, %v690
        %692 = vmatmul.bf16.gmra.mxu0 %v571
        %v693 = vpop.f32.mrf.mxu0
        %v694 = vadd.f32 %v480, %v693
        %v695 = vpop.f32.mrf.mxu0
        %v696 = vadd.f32 %v480, %v695
        %697 = vmatmul.bf16.gmra.mxu0 %v574
        %v698 = vpop.f32.mrf.mxu0
        %v699 = vadd.f32 %v480, %v698
        %v700 = vpop.f32.mrf.mxu0
        %v701 = vadd.f32 %v480, %v700
        %702 = vmatmul.bf16.gmra.mxu0 %v577
        %v703 = vpop.f32.mrf.mxu0
        %v704 = vadd.f32 %v480, %v703
        %v705 = vpop.f32.mrf.mxu0
        %v706 = vadd.f32 %v480, %v705
        %707 = vdwg.mxu0
        %708 = vadd.xlane.f32.xlu0 %v589
        %v709 = vpop.xlane.xlu0 %708
        %710 = vadd.xlane.f32.xlu0 %v591
        %v711 = vpop.xlane.xlu0 %710
        %712 = vadd.xlane.f32.xlu0 %v594
        %v713 = vpop.xlane.xlu0 %712
        %714 = vadd.xlane.f32.xlu0 %v596
        %v715 = vpop.xlane.xlu0 %714
        %716 = vadd.xlane.f32.xlu0 %v599
        %v717 = vpop.xlane.xlu0 %716
        %718 = vadd.xlane.f32.xlu0 %v601
        %v719 = vpop.xlane.xlu0 %718
        %720 = vadd.xlane.f32.xlu0 %v604
        %v721 = vpop.xlane.xlu0 %720
        %722 = vadd.xlane.f32.xlu0 %v606
        %v723 = vpop.xlane.xlu0 %722
        %724 = vadd.xlane.f32.xlu0 %v609
        %v725 = vpop.xlane.xlu0 %724
        %726 = vadd.xlane.f32.xlu0 %v611
        %v727 = vpop.xlane.xlu0 %726
        %728 = vadd.xlane.f32.xlu0 %v614
        %v729 = vpop.xlane.xlu0 %728
        %730 = vadd.xlane.f32.xlu0 %v616
        %v731 = vpop.xlane.xlu0 %730
        %732 = vadd.xlane.f32.xlu0 %v619
        %v733 = vpop.xlane.xlu0 %732
        %734 = vadd.xlane.f32.xlu0 %v621
        %v735 = vpop.xlane.xlu0 %734
        %736 = vadd.xlane.f32.xlu0 %v624
        %v737 = vpop.xlane.xlu0 %736
        %738 = vadd.xlane.f32.xlu0 %v626
        %v739 = vpop.xlane.xlu0 %738
        %740 = vadd.xlane.f32.xlu0 %v629
        %v741 = vpop.xlane.xlu0 %740
        %742 = vadd.xlane.f32.xlu0 %v631
        %v743 = vpop.xlane.xlu0 %742
        %744 = vadd.xlane.f32.xlu0 %v634
        %v745 = vpop.xlane.xlu0 %744
        %746 = vadd.xlane.f32.xlu0 %v636
        %v747 = vpop.xlane.xlu0 %746
        %748 = vadd.xlane.f32.xlu0 %v639
        %v749 = vpop.xlane.xlu0 %748
        %750 = vadd.xlane.f32.xlu0 %v641
        %v751 = vpop.xlane.xlu0 %750
        %752 = vadd.xlane.f32.xlu0 %v644
        %v753 = vpop.xlane.xlu0 %752
        %754 = vadd.xlane.f32.xlu0 %v646
        %v755 = vpop.xlane.xlu0 %754
        %756 = vadd.xlane.f32.xlu0 %v649
        %v757 = vpop.xlane.xlu0 %756
        %758 = vadd.xlane.f32.xlu0 %v651
        %v759 = vpop.xlane.xlu0 %758
        %760 = vadd.xlane.f32.xlu0 %v654
        %v761 = vpop.xlane.xlu0 %760
        %762 = vadd.xlane.f32.xlu0 %v656
        %v763 = vpop.xlane.xlu0 %762
        %764 = vadd.xlane.f32.xlu0 %v659
        %v765 = vpop.xlane.xlu0 %764
        %766 = vadd.xlane.f32.xlu0 %v661
        %v767 = vpop.xlane.xlu0 %766
        %768 = vadd.xlane.f32.xlu0 %v664
        %v769 = vpop.xlane.xlu0 %768
        %770 = vadd.xlane.f32.xlu0 %v666
        %v771 = vpop.xlane.xlu0 %770
        %772 = vadd.xlane.f32.xlu0 %v669
        %v773 = vpop.xlane.xlu0 %772
        %774 = vadd.xlane.f32.xlu0 %v671
        %v775 = vpop.xlane.xlu0 %774
        %776 = vadd.xlane.f32.xlu0 %v674
        %v777 = vpop.xlane.xlu0 %776
        %778 = vadd.xlane.f32.xlu0 %v676
        %v779 = vpop.xlane.xlu0 %778
        %780 = vadd.xlane.f32.xlu0 %v679
        %v781 = vpop.xlane.xlu0 %780
        %782 = vadd.xlane.f32.xlu0 %v681
        %v783 = vpop.xlane.xlu0 %782
        %784 = vadd.xlane.f32.xlu0 %v684
        %v785 = vpop.xlane.xlu0 %784
        %786 = vadd.xlane.f32.xlu0 %v686
        %v787 = vpop.xlane.xlu0 %786
        %788 = vadd.xlane.f32.xlu0 %v689
        %v789 = vpop.xlane.xlu0 %788
        %790 = vadd.xlane.f32.xlu0 %v691
        %v791 = vpop.xlane.xlu0 %790
        %792 = vadd.xlane.f32.xlu0 %v694
        %v793 = vpop.xlane.xlu0 %792
        %794 = vadd.xlane.f32.xlu0 %v696
        %v795 = vpop.xlane.xlu0 %794
        %796 = vadd.xlane.f32.xlu0 %v699
        %v797 = vpop.xlane.xlu0 %796
        %798 = vadd.xlane.f32.xlu0 %v701
        %v799 = vpop.xlane.xlu0 %798
        %800 = vadd.xlane.f32.xlu0 %v704
        %v801 = vpop.xlane.xlu0 %800
        %802 = vadd.xlane.f32.xlu0 %v706
        %v803 = vpop.xlane.xlu0 %802
        %v804 = vmul.f32 %v589, %v589
        %v805 = vmul.f32 %v591, %v591
        %v806 = vmul.f32 %v594, %v594
        %v807 = vmul.f32 %v596, %v596
        %v808 = vmul.f32 %v599, %v599
        %v809 = vmul.f32 %v601, %v601
        %v810 = vmul.f32 %v604, %v604
        %v811 = vmul.f32 %v606, %v606
        %v812 = vmul.f32 %v609, %v609
        %v813 = vmul.f32 %v611, %v611
        %v814 = vmul.f32 %v614, %v614
        %v815 = vmul.f32 %v616, %v616
        %v816 = vmul.f32 %v619, %v619
        %v817 = vmul.f32 %v621, %v621
        %v818 = vmul.f32 %v624, %v624
        %v819 = vmul.f32 %v626, %v626
        %v820 = vmul.f32 %v629, %v629
        %v821 = vmul.f32 %v631, %v631
        %v822 = vmul.f32 %v634, %v634
        %v823 = vmul.f32 %v636, %v636
        %v824 = vmul.f32 %v639, %v639
        %v825 = vmul.f32 %v641, %v641
        %v826 = vmul.f32 %v644, %v644
        %v827 = vmul.f32 %v646, %v646
        %v828 = vmul.f32 %v649, %v649
        %v829 = vmul.f32 %v651, %v651
        %v830 = vmul.f32 %v654, %v654
        %v831 = vmul.f32 %v656, %v656
        %v832 = vmul.f32 %v659, %v659
        %v833 = vmul.f32 %v661, %v661
        %v834 = vmul.f32 %v664, %v664
        %v835 = vmul.f32 %v666, %v666
        %v836 = vmul.f32 %v669, %v669
        %v837 = vmul.f32 %v671, %v671
        %v838 = vmul.f32 %v674, %v674
        %v839 = vmul.f32 %v676, %v676
        %v840 = vmul.f32 %v679, %v679
        %v841 = vmul.f32 %v681, %v681
        %v842 = vmul.f32 %v684, %v684
        %v843 = vmul.f32 %v686, %v686
        %v844 = vmul.f32 %v689, %v689
        %v845 = vmul.f32 %v691, %v691
        %v846 = vmul.f32 %v694, %v694
        %v847 = vmul.f32 %v696, %v696
        %v848 = vmul.f32 %v699, %v699
        %v849 = vmul.f32 %v701, %v701
        %v850 = vmul.f32 %v704, %v704
        %v851 = vmul.f32 %v706, %v706
        %852 = vadd.xlane.f32.xlu0 %v804
        %v853 = vpop.xlane.xlu0 %852
        %854 = vadd.xlane.f32.xlu0 %v805
        %v855 = vpop.xlane.xlu0 %854
        %856 = vadd.xlane.f32.xlu0 %v806
        %v857 = vpop.xlane.xlu0 %856
        %858 = vadd.xlane.f32.xlu0 %v807
        %v859 = vpop.xlane.xlu0 %858
        %860 = vadd.xlane.f32.xlu0 %v808
        %v861 = vpop.xlane.xlu0 %860
        %862 = vadd.xlane.f32.xlu0 %v809
        %v863 = vpop.xlane.xlu0 %862
        %864 = vadd.xlane.f32.xlu0 %v810
        %v865 = vpop.xlane.xlu0 %864
        %866 = vadd.xlane.f32.xlu0 %v811
        %v867 = vpop.xlane.xlu0 %866
        %868 = vadd.xlane.f32.xlu0 %v812
        %v869 = vpop.xlane.xlu0 %868
        %870 = vadd.xlane.f32.xlu0 %v813
        %v871 = vpop.xlane.xlu0 %870
        %872 = vadd.xlane.f32.xlu0 %v814
        %v873 = vpop.xlane.xlu0 %872
        %874 = vadd.xlane.f32.xlu0 %v815
        %v875 = vpop.xlane.xlu0 %874
        %876 = vadd.xlane.f32.xlu0 %v816
        %v877 = vpop.xlane.xlu0 %876
        %878 = vadd.xlane.f32.xlu0 %v817
        %v879 = vpop.xlane.xlu0 %878
        %880 = vadd.xlane.f32.xlu0 %v818
        %v881 = vpop.xlane.xlu0 %880
        %882 = vadd.xlane.f32.xlu0 %v819
        %v883 = vpop.xlane.xlu0 %882
        %884 = vadd.xlane.f32.xlu0 %v820
        %v885 = vpop.xlane.xlu0 %884
        %886 = vadd.xlane.f32.xlu0 %v821
        %v887 = vpop.xlane.xlu0 %886
        %888 = vadd.xlane.f32.xlu0 %v822
        %v889 = vpop.xlane.xlu0 %888
        %890 = vadd.xlane.f32.xlu0 %v823
        %v891 = vpop.xlane.xlu0 %890
        %892 = vadd.xlane.f32.xlu0 %v824
        %v893 = vpop.xlane.xlu0 %892
        %894 = vadd.xlane.f32.xlu0 %v825
        %v895 = vpop.xlane.xlu0 %894
        %896 = vadd.xlane.f32.xlu0 %v826
        %v897 = vpop.xlane.xlu0 %896
        %898 = vadd.xlane.f32.xlu0 %v827
        %v899 = vpop.xlane.xlu0 %898
        %900 = vadd.xlane.f32.xlu0 %v828
        %v901 = vpop.xlane.xlu0 %900
        %902 = vadd.xlane.f32.xlu0 %v829
        %v903 = vpop.xlane.xlu0 %902
        %904 = vadd.xlane.f32.xlu0 %v830
        %v905 = vpop.xlane.xlu0 %904
        %906 = vadd.xlane.f32.xlu0 %v831
        %v907 = vpop.xlane.xlu0 %906
        %908 = vadd.xlane.f32.xlu0 %v832
        %v909 = vpop.xlane.xlu0 %908
        %910 = vadd.xlane.f32.xlu0 %v833
        %v911 = vpop.xlane.xlu0 %910
        %912 = vadd.xlane.f32.xlu0 %v834
        %v913 = vpop.xlane.xlu0 %912
        %914 = vadd.xlane.f32.xlu0 %v835
        %v915 = vpop.xlane.xlu0 %914
        %916 = vadd.xlane.f32.xlu0 %v836
        %v917 = vpop.xlane.xlu0 %916
        %918 = vadd.xlane.f32.xlu0 %v837
        %v919 = vpop.xlane.xlu0 %918
        %920 = vadd.xlane.f32.xlu0 %v838
        %v921 = vpop.xlane.xlu0 %920
        %922 = vadd.xlane.f32.xlu0 %v839
        %v923 = vpop.xlane.xlu0 %922
        %924 = vadd.xlane.f32.xlu0 %v840
        %v925 = vpop.xlane.xlu0 %924
        %926 = vadd.xlane.f32.xlu0 %v841
        %v927 = vpop.xlane.xlu0 %926
        %928 = vadd.xlane.f32.xlu0 %v842
        %v929 = vpop.xlane.xlu0 %928
        %930 = vadd.xlane.f32.xlu0 %v843
        %v931 = vpop.xlane.xlu0 %930
        %932 = vadd.xlane.f32.xlu0 %v844
        %v933 = vpop.xlane.xlu0 %932
        %934 = vadd.xlane.f32.xlu0 %v845
        %v935 = vpop.xlane.xlu0 %934
        %936 = vadd.xlane.f32.xlu0 %v846
        %v937 = vpop.xlane.xlu0 %936
        %938 = vadd.xlane.f32.xlu0 %v847
        %v939 = vpop.xlane.xlu0 %938
        %940 = vadd.xlane.f32.xlu0 %v848
        %v941 = vpop.xlane.xlu0 %940
        %942 = vadd.xlane.f32.xlu0 %v849
        %v943 = vpop.xlane.xlu0 %942
        %944 = vadd.xlane.f32.xlu0 %v850
        %v945 = vpop.xlane.xlu0 %944
        %946 = vadd.xlane.f32.xlu0 %v851
        %v947 = vpop.xlane.xlu0 %946
        %v948 = vmul.f32 %v709, 0.0078125
        %v949 = vmul.f32 %v711, 0.0078125
        %v950 = vmul.f32 %v713, 0.0078125
        %v951 = vmul.f32 %v715, 0.0078125
        %v952 = vmul.f32 %v717, 0.0078125
        %v953 = vmul.f32 %v719, 0.0078125
        %v954 = vmul.f32 %v721, 0.0078125
        %v955 = vmul.f32 %v723, 0.0078125
        %v956 = vmul.f32 %v725, 0.0078125
        %v957 = vmul.f32 %v727, 0.0078125
        %v958 = vmul.f32 %v729, 0.0078125
        %v959 = vmul.f32 %v731, 0.0078125
        %v960 = vmul.f32 %v733, 0.0078125
        %v961 = vmul.f32 %v735, 0.0078125
        %v962 = vmul.f32 %v737, 0.0078125
        %v963 = vmul.f32 %v739, 0.0078125
        %v964 = vmul.f32 %v741, 0.0078125
        %v965 = vmul.f32 %v743, 0.0078125
        %v966 = vmul.f32 %v745, 0.0078125
        %v967 = vmul.f32 %v747, 0.0078125
        %v968 = vmul.f32 %v749, 0.0078125
        %v969 = vmul.f32 %v751, 0.0078125
        %v970 = vmul.f32 %v753, 0.0078125
        %v971 = vmul.f32 %v755, 0.0078125
        %v972 = vmul.f32 %v757, 0.0078125
        %v973 = vmul.f32 %v759, 0.0078125
        %v974 = vmul.f32 %v761, 0.0078125
        %v975 = vmul.f32 %v763, 0.0078125
        %v976 = vmul.f32 %v765, 0.0078125
        %v977 = vmul.f32 %v767, 0.0078125
        %v978 = vmul.f32 %v769, 0.0078125
        %v979 = vmul.f32 %v771, 0.0078125
        %v980 = vmul.f32 %v773, 0.0078125
        %v981 = vmul.f32 %v775, 0.0078125
        %v982 = vmul.f32 %v777, 0.0078125
        %v983 = vmul.f32 %v779, 0.0078125
        %v984 = vmul.f32 %v781, 0.0078125
        %v985 = vmul.f32 %v783, 0.0078125
        %v986 = vmul.f32 %v785, 0.0078125
        %v987 = vmul.f32 %v787, 0.0078125
        %v988 = vmul.f32 %v789, 0.0078125
        %v989 = vmul.f32 %v791, 0.0078125
        %v990 = vmul.f32 %v793, 0.0078125
        %v991 = vmul.f32 %v795, 0.0078125
        %v992 = vmul.f32 %v797, 0.0078125
        %v993 = vmul.f32 %v799, 0.0078125
        %v994 = vmul.f32 %v801, 0.0078125
        %v995 = vmul.f32 %v803, 0.0078125
        %v996 = vmul.f32 %v853, 0.0078125
        %v997 = vmul.f32 %v855, 0.0078125
        %v998 = vmul.f32 %v857, 0.0078125
        %v999 = vmul.f32 %v859, 0.0078125
        %v1000 = vmul.f32 %v861, 0.0078125
        %v1001 = vmul.f32 %v863, 0.0078125
        %v1002 = vmul.f32 %v865, 0.0078125
        %v1003 = vmul.f32 %v867, 0.0078125
        %v1004 = vmul.f32 %v869, 0.0078125
        %v1005 = vmul.f32 %v871, 0.0078125
        %v1006 = vmul.f32 %v873, 0.0078125
        %v1007 = vmul.f32 %v875, 0.0078125
        %v1008 = vmul.f32 %v877, 0.0078125
        %v1009 = vmul.f32 %v879, 0.0078125
        %v1010 = vmul.f32 %v881, 0.0078125
        %v1011 = vmul.f32 %v883, 0.0078125
        %v1012 = vmul.f32 %v885, 0.0078125
        %v1013 = vmul.f32 %v887, 0.0078125
        %v1014 = vmul.f32 %v889, 0.0078125
        %v1015 = vmul.f32 %v891, 0.0078125
        %v1016 = vmul.f32 %v893, 0.0078125
        %v1017 = vmul.f32 %v895, 0.0078125
        %v1018 = vmul.f32 %v897, 0.0078125
        %v1019 = vmul.f32 %v899, 0.0078125
        %v1020 = vmul.f32 %v901, 0.0078125
        %v1021 = vmul.f32 %v903, 0.0078125
        %v1022 = vmul.f32 %v905, 0.0078125
        %v1023 = vmul.f32 %v907, 0.0078125
        %v1024 = vmul.f32 %v909, 0.0078125
        %v1025 = vmul.f32 %v911, 0.0078125
        %v1026 = vmul.f32 %v913, 0.0078125
        %v1027 = vmul.f32 %v915, 0.0078125
        %v1028 = vmul.f32 %v917, 0.0078125
        %v1029 = vmul.f32 %v919, 0.0078125
        %v1030 = vmul.f32 %v921, 0.0078125
        %v1031 = vmul.f32 %v923, 0.0078125
        %v1032 = vmul.f32 %v925, 0.0078125
        %v1033 = vmul.f32 %v927, 0.0078125
        %v1034 = vmul.f32 %v929, 0.0078125
        %v1035 = vmul.f32 %v931, 0.0078125
        %v1036 = vmul.f32 %v933, 0.0078125
        %v1037 = vmul.f32 %v935, 0.0078125
        %v1038 = vmul.f32 %v937, 0.0078125
        %v1039 = vmul.f32 %v939, 0.0078125
        %v1040 = vmul.f32 %v941, 0.0078125
        %v1041 = vmul.f32 %v943, 0.0078125
        %v1042 = vmul.f32 %v945, 0.0078125
        %v1043 = vmul.f32 %v947, 0.0078125
        %v1044 = vmul.f32 %v948, %v948
        %v1045 = vmul.f32 %v949, %v949
        %v1046 = vmul.f32 %v950, %v950
        %v1047 = vmul.f32 %v951, %v951
        %v1048 = vmul.f32 %v952, %v952
        %v1049 = vmul.f32 %v953, %v953
        %v1050 = vmul.f32 %v954, %v954
        %v1051 = vmul.f32 %v955, %v955
        %v1052 = vmul.f32 %v956, %v956
        %v1053 = vmul.f32 %v957, %v957
        %v1054 = vmul.f32 %v958, %v958
        %v1055 = vmul.f32 %v959, %v959
        %v1056 = vmul.f32 %v960, %v960
        %v1057 = vmul.f32 %v961, %v961
        %v1058 = vmul.f32 %v962, %v962
        %v1059 = vmul.f32 %v963, %v963
        %v1060 = vmul.f32 %v964, %v964
        %v1061 = vmul.f32 %v965, %v965
        %v1062 = vmul.f32 %v966, %v966
        %v1063 = vmul.f32 %v967, %v967
        %v1064 = vmul.f32 %v968, %v968
        %v1065 = vmul.f32 %v969, %v969
        %v1066 = vmul.f32 %v970, %v970
        %v1067 = vmul.f32 %v971, %v971
        %v1068 = vmul.f32 %v972, %v972
        %v1069 = vmul.f32 %v973, %v973
        %v1070 = vmul.f32 %v974, %v974
        %v1071 = vmul.f32 %v975, %v975
        %v1072 = vmul.f32 %v976, %v976
        %v1073 = vmul.f32 %v977, %v977
        %v1074 = vmul.f32 %v978, %v978
        %v1075 = vmul.f32 %v979, %v979
        %v1076 = vmul.f32 %v980, %v980
        %v1077 = vmul.f32 %v981, %v981
        %v1078 = vmul.f32 %v982, %v982
        %v1079 = vmul.f32 %v983, %v983
        %v1080 = vmul.f32 %v984, %v984
        %v1081 = vmul.f32 %v985, %v985
        %v1082 = vmul.f32 %v986, %v986
        %v1083 = vmul.f32 %v987, %v987
        %v1084 = vmul.f32 %v988, %v988
        %v1085 = vmul.f32 %v989, %v989
        %v1086 = vmul.f32 %v990, %v990
        %v1087 = vmul.f32 %v991, %v991
        %v1088 = vmul.f32 %v992, %v992
        %v1089 = vmul.f32 %v993, %v993
        %v1090 = vmul.f32 %v994, %v994
        %v1091 = vmul.f32 %v995, %v995
        %v1092 = vsub.f32 %v996, %v1044
        %v1093 = vsub.f32 %v997, %v1045
        %v1094 = vsub.f32 %v998, %v1046
        %v1095 = vsub.f32 %v999, %v1047
        %v1096 = vsub.f32 %v1000, %v1048
        %v1097 = vsub.f32 %v1001, %v1049
        %v1098 = vsub.f32 %v1002, %v1050
        %v1099 = vsub.f32 %v1003, %v1051
        %v1100 = vsub.f32 %v1004, %v1052
        %v1101 = vsub.f32 %v1005, %v1053
        %v1102 = vsub.f32 %v1006, %v1054
        %v1103 = vsub.f32 %v1007, %v1055
        %v1104 = vsub.f32 %v1008, %v1056
        %v1105 = vsub.f32 %v1009, %v1057
        %v1106 = vsub.f32 %v1010, %v1058
        %v1107 = vsub.f32 %v1011, %v1059
        %v1108 = vsub.f32 %v1012, %v1060
        %v1109 = vsub.f32 %v1013, %v1061
        %v1110 = vsub.f32 %v1014, %v1062
        %v1111 = vsub.f32 %v1015, %v1063
        %v1112 = vsub.f32 %v1016, %v1064
        %v1113 = vsub.f32 %v1017, %v1065
        %v1114 = vsub.f32 %v1018, %v1066
        %v1115 = vsub.f32 %v1019, %v1067
        %v1116 = vsub.f32 %v1020, %v1068
        %v1117 = vsub.f32 %v1021, %v1069
        %v1118 = vsub.f32 %v1022, %v1070
        %v1119 = vsub.f32 %v1023, %v1071
        %v1120 = vsub.f32 %v1024, %v1072
        %v1121 = vsub.f32 %v1025, %v1073
        %v1122 = vsub.f32 %v1026, %v1074
        %v1123 = vsub.f32 %v1027, %v1075
        %v1124 = vsub.f32 %v1028, %v1076
        %v1125 = vsub.f32 %v1029, %v1077
        %v1126 = vsub.f32 %v1030, %v1078
        %v1127 = vsub.f32 %v1031, %v1079
        %v1128 = vsub.f32 %v1032, %v1080
        %v1129 = vsub.f32 %v1033, %v1081
        %v1130 = vsub.f32 %v1034, %v1082
        %v1131 = vsub.f32 %v1035, %v1083
        %v1132 = vsub.f32 %v1036, %v1084
        %v1133 = vsub.f32 %v1037, %v1085
        %v1134 = vsub.f32 %v1038, %v1086
        %v1135 = vsub.f32 %v1039, %v1087
        %v1136 = vsub.f32 %v1040, %v1088
        %v1137 = vsub.f32 %v1041, %v1089
        %v1138 = vsub.f32 %v1042, %v1090
        %v1139 = vsub.f32 %v1043, %v1091
        %v1140 = vmax.f32 %v1092, 0.0
        %v1141 = vmax.f32 %v1093, 0.0
        %v1142 = vmax.f32 %v1094, 0.0
        %v1143 = vmax.f32 %v1095, 0.0
        %v1144 = vmax.f32 %v1096, 0.0
        %v1145 = vmax.f32 %v1097, 0.0
        %v1146 = vmax.f32 %v1098, 0.0
        %v1147 = vmax.f32 %v1099, 0.0
        %v1148 = vmax.f32 %v1100, 0.0
        %v1149 = vmax.f32 %v1101, 0.0
        %v1150 = vmax.f32 %v1102, 0.0
        %v1151 = vmax.f32 %v1103, 0.0
        %v1152 = vmax.f32 %v1104, 0.0
        %v1153 = vmax.f32 %v1105, 0.0
        %v1154 = vmax.f32 %v1106, 0.0
        %v1155 = vmax.f32 %v1107, 0.0
        %v1156 = vmax.f32 %v1108, 0.0
        %v1157 = vmax.f32 %v1109, 0.0
        %v1158 = vmax.f32 %v1110, 0.0
        %v1159 = vmax.f32 %v1111, 0.0
        %v1160 = vmax.f32 %v1112, 0.0
        %v1161 = vmax.f32 %v1113, 0.0
        %v1162 = vmax.f32 %v1114, 0.0
        %v1163 = vmax.f32 %v1115, 0.0
        %v1164 = vmax.f32 %v1116, 0.0
        %v1165 = vmax.f32 %v1117, 0.0
        %v1166 = vmax.f32 %v1118, 0.0
        %v1167 = vmax.f32 %v1119, 0.0
        %v1168 = vmax.f32 %v1120, 0.0
        %v1169 = vmax.f32 %v1121, 0.0
        %v1170 = vmax.f32 %v1122, 0.0
        %v1171 = vmax.f32 %v1123, 0.0
        %v1172 = vmax.f32 %v1124, 0.0
        %v1173 = vmax.f32 %v1125, 0.0
        %v1174 = vmax.f32 %v1126, 0.0
        %v1175 = vmax.f32 %v1127, 0.0
        %v1176 = vmax.f32 %v1128, 0.0
        %v1177 = vmax.f32 %v1129, 0.0
        %v1178 = vmax.f32 %v1130, 0.0
        %v1179 = vmax.f32 %v1131, 0.0
        %v1180 = vmax.f32 %v1132, 0.0
        %v1181 = vmax.f32 %v1133, 0.0
        %v1182 = vmax.f32 %v1134, 0.0
        %v1183 = vmax.f32 %v1135, 0.0
        %v1184 = vmax.f32 %v1136, 0.0
        %v1185 = vmax.f32 %v1137, 0.0
        %v1186 = vmax.f32 %v1138, 0.0
        %v1187 = vmax.f32 %v1139, 0.0
        %v1188 = vsub.f32 %v589, %v948
        %v1189 = vsub.f32 %v591, %v949
        %v1190 = vsub.f32 %v594, %v950
        %v1191 = vsub.f32 %v596, %v951
        %v1192 = vsub.f32 %v599, %v952
        %v1193 = vsub.f32 %v601, %v953
        %v1194 = vsub.f32 %v604, %v954
        %v1195 = vsub.f32 %v606, %v955
        %v1196 = vsub.f32 %v609, %v956
        %v1197 = vsub.f32 %v611, %v957
        %v1198 = vsub.f32 %v614, %v958
        %v1199 = vsub.f32 %v616, %v959
        %v1200 = vsub.f32 %v619, %v960
        %v1201 = vsub.f32 %v621, %v961
        %v1202 = vsub.f32 %v624, %v962
        %v1203 = vsub.f32 %v626, %v963
        %v1204 = vsub.f32 %v629, %v964
        %v1205 = vsub.f32 %v631, %v965
        %v1206 = vsub.f32 %v634, %v966
        %v1207 = vsub.f32 %v636, %v967
        %v1208 = vsub.f32 %v639, %v968
        %v1209 = vsub.f32 %v641, %v969
        %v1210 = vsub.f32 %v644, %v970
        %v1211 = vsub.f32 %v646, %v971
        %v1212 = vsub.f32 %v649, %v972
        %v1213 = vsub.f32 %v651, %v973
        %v1214 = vsub.f32 %v654, %v974
        %v1215 = vsub.f32 %v656, %v975
        %v1216 = vsub.f32 %v659, %v976
        %v1217 = vsub.f32 %v661, %v977
        %v1218 = vsub.f32 %v664, %v978
        %v1219 = vsub.f32 %v666, %v979
        %v1220 = vsub.f32 %v669, %v980
        %v1221 = vsub.f32 %v671, %v981
        %v1222 = vsub.f32 %v674, %v982
        %v1223 = vsub.f32 %v676, %v983
        %v1224 = vsub.f32 %v679, %v984
        %v1225 = vsub.f32 %v681, %v985
        %v1226 = vsub.f32 %v684, %v986
        %v1227 = vsub.f32 %v686, %v987
        %v1228 = vsub.f32 %v689, %v988
        %v1229 = vsub.f32 %v691, %v989
        %v1230 = vsub.f32 %v694, %v990
        %v1231 = vsub.f32 %v696, %v991
        %v1232 = vsub.f32 %v699, %v992
        %v1233 = vsub.f32 %v701, %v993
        %v1234 = vsub.f32 %v704, %v994
        %v1235 = vsub.f32 %v706, %v995
        %v1236 = vadd.f32 %v1140, 1e-05
        %v1237 = vadd.f32 %v1141, 1e-05
        %v1238 = vadd.f32 %v1142, 1e-05
        %v1239 = vadd.f32 %v1143, 1e-05
        %v1240 = vadd.f32 %v1144, 1e-05
        %v1241 = vadd.f32 %v1145, 1e-05
        %v1242 = vadd.f32 %v1146, 1e-05
        %v1243 = vadd.f32 %v1147, 1e-05
        %v1244 = vadd.f32 %v1148, 1e-05
        %v1245 = vadd.f32 %v1149, 1e-05
        %v1246 = vadd.f32 %v1150, 1e-05
        %v1247 = vadd.f32 %v1151, 1e-05
        %v1248 = vadd.f32 %v1152, 1e-05
        %v1249 = vadd.f32 %v1153, 1e-05
        %v1250 = vadd.f32 %v1154, 1e-05
        %v1251 = vadd.f32 %v1155, 1e-05
        %v1252 = vadd.f32 %v1156, 1e-05
        %v1253 = vadd.f32 %v1157, 1e-05
        %v1254 = vadd.f32 %v1158, 1e-05
        %v1255 = vadd.f32 %v1159, 1e-05
        %v1256 = vadd.f32 %v1160, 1e-05
        %v1257 = vadd.f32 %v1161, 1e-05
        %v1258 = vadd.f32 %v1162, 1e-05
        %v1259 = vadd.f32 %v1163, 1e-05
        %v1260 = vadd.f32 %v1164, 1e-05
        %v1261 = vadd.f32 %v1165, 1e-05
        %v1262 = vadd.f32 %v1166, 1e-05
        %v1263 = vadd.f32 %v1167, 1e-05
        %v1264 = vadd.f32 %v1168, 1e-05
        %v1265 = vadd.f32 %v1169, 1e-05
        %v1266 = vadd.f32 %v1170, 1e-05
        %v1267 = vadd.f32 %v1171, 1e-05
        %v1268 = vadd.f32 %v1172, 1e-05
        %v1269 = vadd.f32 %v1173, 1e-05
        %v1270 = vadd.f32 %v1174, 1e-05
        %v1271 = vadd.f32 %v1175, 1e-05
        %v1272 = vadd.f32 %v1176, 1e-05
        %v1273 = vadd.f32 %v1177, 1e-05
        %v1274 = vadd.f32 %v1178, 1e-05
        %v1275 = vadd.f32 %v1179, 1e-05
        %v1276 = vadd.f32 %v1180, 1e-05
        %v1277 = vadd.f32 %v1181, 1e-05
        %v1278 = vadd.f32 %v1182, 1e-05
        %v1279 = vadd.f32 %v1183, 1e-05
        %v1280 = vadd.f32 %v1184, 1e-05
        %v1281 = vadd.f32 %v1185, 1e-05
        %v1282 = vadd.f32 %v1186, 1e-05
        %v1283 = vadd.f32 %v1187, 1e-05
        %v1284 = vrsqrt.pop %v1236
        %v1285 = vmul.f32 %v1284, %v1236
        %v1286 = vmul.f32 %v1285, %v1284
        %v1287 = vmul.f32 0.5, %v1286
        %v1288 = vsub.f32 1.5, %v1287
        %v1289 = vmul.f32 %v1284, %v1288
        %vm1290 = vweird.f32 %v1236
        %vm1291 = vweird.f32 %v1284
        %vm1292 = vmor %vm1290, %vm1291
        %v1293 = vsel %vm1292, %v1284, %v1289
        %v1294 = vrsqrt.pop %v1237
        %v1295 = vmul.f32 %v1294, %v1237
        %v1296 = vmul.f32 %v1295, %v1294
        %v1297 = vmul.f32 0.5, %v1296
        %v1298 = vsub.f32 1.5, %v1297
        %v1299 = vmul.f32 %v1294, %v1298
        %vm1300 = vweird.f32 %v1237
        %vm1301 = vweird.f32 %v1294
        %vm1302 = vmor %vm1300, %vm1301
        %v1303 = vsel %vm1302, %v1294, %v1299
        %v1304 = vrsqrt.pop %v1238
        %v1305 = vmul.f32 %v1304, %v1238
        %v1306 = vmul.f32 %v1305, %v1304
        %v1307 = vmul.f32 0.5, %v1306
        %v1308 = vsub.f32 1.5, %v1307
        %v1309 = vmul.f32 %v1304, %v1308
        %vm1310 = vweird.f32 %v1238
        %vm1311 = vweird.f32 %v1304
        %vm1312 = vmor %vm1310, %vm1311
        %v1313 = vsel %vm1312, %v1304, %v1309
        %v1314 = vrsqrt.pop %v1239
        %v1315 = vmul.f32 %v1314, %v1239
        %v1316 = vmul.f32 %v1315, %v1314
        %v1317 = vmul.f32 0.5, %v1316
        %v1318 = vsub.f32 1.5, %v1317
        %v1319 = vmul.f32 %v1314, %v1318
        %vm1320 = vweird.f32 %v1239
        %vm1321 = vweird.f32 %v1314
        %vm1322 = vmor %vm1320, %vm1321
        %v1323 = vsel %vm1322, %v1314, %v1319
        %v1324 = vrsqrt.pop %v1240
        %v1325 = vmul.f32 %v1324, %v1240
        %v1326 = vmul.f32 %v1325, %v1324
        %v1327 = vmul.f32 0.5, %v1326
        %v1328 = vsub.f32 1.5, %v1327
        %v1329 = vmul.f32 %v1324, %v1328
        %vm1330 = vweird.f32 %v1240
        %vm1331 = vweird.f32 %v1324
        %vm1332 = vmor %vm1330, %vm1331
        %v1333 = vsel %vm1332, %v1324, %v1329
        %v1334 = vrsqrt.pop %v1241
        %v1335 = vmul.f32 %v1334, %v1241
        %v1336 = vmul.f32 %v1335, %v1334
        %v1337 = vmul.f32 0.5, %v1336
        %v1338 = vsub.f32 1.5, %v1337
        %v1339 = vmul.f32 %v1334, %v1338
        %vm1340 = vweird.f32 %v1241
        %vm1341 = vweird.f32 %v1334
        %vm1342 = vmor %vm1340, %vm1341
        %v1343 = vsel %vm1342, %v1334, %v1339
        %v1344 = vrsqrt.pop %v1242
        %v1345 = vmul.f32 %v1344, %v1242
        %v1346 = vmul.f32 %v1345, %v1344
        %v1347 = vmul.f32 0.5, %v1346
        %v1348 = vsub.f32 1.5, %v1347
        %v1349 = vmul.f32 %v1344, %v1348
        %vm1350 = vweird.f32 %v1242
        %vm1351 = vweird.f32 %v1344
        %vm1352 = vmor %vm1350, %vm1351
        %v1353 = vsel %vm1352, %v1344, %v1349
        %v1354 = vrsqrt.pop %v1243
        %v1355 = vmul.f32 %v1354, %v1243
        %v1356 = vmul.f32 %v1355, %v1354
        %v1357 = vmul.f32 0.5, %v1356
        %v1358 = vsub.f32 1.5, %v1357
        %v1359 = vmul.f32 %v1354, %v1358
        %vm1360 = vweird.f32 %v1243
        %vm1361 = vweird.f32 %v1354
        %vm1362 = vmor %vm1360, %vm1361
        %v1363 = vsel %vm1362, %v1354, %v1359
        %v1364 = vrsqrt.pop %v1244
        %v1365 = vmul.f32 %v1364, %v1244
        %v1366 = vmul.f32 %v1365, %v1364
        %v1367 = vmul.f32 0.5, %v1366
        %v1368 = vsub.f32 1.5, %v1367
        %v1369 = vmul.f32 %v1364, %v1368
        %vm1370 = vweird.f32 %v1244
        %vm1371 = vweird.f32 %v1364
        %vm1372 = vmor %vm1370, %vm1371
        %v1373 = vsel %vm1372, %v1364, %v1369
        %v1374 = vrsqrt.pop %v1245
        %v1375 = vmul.f32 %v1374, %v1245
        %v1376 = vmul.f32 %v1375, %v1374
        %v1377 = vmul.f32 0.5, %v1376
        %v1378 = vsub.f32 1.5, %v1377
        %v1379 = vmul.f32 %v1374, %v1378
        %vm1380 = vweird.f32 %v1245
        %vm1381 = vweird.f32 %v1374
        %vm1382 = vmor %vm1380, %vm1381
        %v1383 = vsel %vm1382, %v1374, %v1379
        %v1384 = vrsqrt.pop %v1246
        %v1385 = vmul.f32 %v1384, %v1246
        %v1386 = vmul.f32 %v1385, %v1384
        %v1387 = vmul.f32 0.5, %v1386
        %v1388 = vsub.f32 1.5, %v1387
        %v1389 = vmul.f32 %v1384, %v1388
        %vm1390 = vweird.f32 %v1246
        %vm1391 = vweird.f32 %v1384
        %vm1392 = vmor %vm1390, %vm1391
        %v1393 = vsel %vm1392, %v1384, %v1389
        %v1394 = vrsqrt.pop %v1247
        %v1395 = vmul.f32 %v1394, %v1247
        %v1396 = vmul.f32 %v1395, %v1394
        %v1397 = vmul.f32 0.5, %v1396
        %v1398 = vsub.f32 1.5, %v1397
        %v1399 = vmul.f32 %v1394, %v1398
        %vm1400 = vweird.f32 %v1247
        %vm1401 = vweird.f32 %v1394
        %vm1402 = vmor %vm1400, %vm1401
        %v1403 = vsel %vm1402, %v1394, %v1399
        %v1404 = vrsqrt.pop %v1248
        %v1405 = vmul.f32 %v1404, %v1248
        %v1406 = vmul.f32 %v1405, %v1404
        %v1407 = vmul.f32 0.5, %v1406
        %v1408 = vsub.f32 1.5, %v1407
        %v1409 = vmul.f32 %v1404, %v1408
        %vm1410 = vweird.f32 %v1248
        %vm1411 = vweird.f32 %v1404
        %vm1412 = vmor %vm1410, %vm1411
        %v1413 = vsel %vm1412, %v1404, %v1409
        %v1414 = vrsqrt.pop %v1249
        %v1415 = vmul.f32 %v1414, %v1249
        %v1416 = vmul.f32 %v1415, %v1414
        %v1417 = vmul.f32 0.5, %v1416
        %v1418 = vsub.f32 1.5, %v1417
        %v1419 = vmul.f32 %v1414, %v1418
        %vm1420 = vweird.f32 %v1249
        %vm1421 = vweird.f32 %v1414
        %vm1422 = vmor %vm1420, %vm1421
        %v1423 = vsel %vm1422, %v1414, %v1419
        %v1424 = vrsqrt.pop %v1250
        %v1425 = vmul.f32 %v1424, %v1250
        %v1426 = vmul.f32 %v1425, %v1424
        %v1427 = vmul.f32 0.5, %v1426
        %v1428 = vsub.f32 1.5, %v1427
        %v1429 = vmul.f32 %v1424, %v1428
        %vm1430 = vweird.f32 %v1250
        %vm1431 = vweird.f32 %v1424
        %vm1432 = vmor %vm1430, %vm1431
        %v1433 = vsel %vm1432, %v1424, %v1429
        %v1434 = vrsqrt.pop %v1251
        %v1435 = vmul.f32 %v1434, %v1251
        %v1436 = vmul.f32 %v1435, %v1434
        %v1437 = vmul.f32 0.5, %v1436
        %v1438 = vsub.f32 1.5, %v1437
        %v1439 = vmul.f32 %v1434, %v1438
        %vm1440 = vweird.f32 %v1251
        %vm1441 = vweird.f32 %v1434
        %vm1442 = vmor %vm1440, %vm1441
        %v1443 = vsel %vm1442, %v1434, %v1439
        %v1444 = vrsqrt.pop %v1252
        %v1445 = vmul.f32 %v1444, %v1252
        %v1446 = vmul.f32 %v1445, %v1444
        %v1447 = vmul.f32 0.5, %v1446
        %v1448 = vsub.f32 1.5, %v1447
        %v1449 = vmul.f32 %v1444, %v1448
        %vm1450 = vweird.f32 %v1252
        %vm1451 = vweird.f32 %v1444
        %vm1452 = vmor %vm1450, %vm1451
        %v1453 = vsel %vm1452, %v1444, %v1449
        %v1454 = vrsqrt.pop %v1253
        %v1455 = vmul.f32 %v1454, %v1253
        %v1456 = vmul.f32 %v1455, %v1454
        %v1457 = vmul.f32 0.5, %v1456
        %v1458 = vsub.f32 1.5, %v1457
        %v1459 = vmul.f32 %v1454, %v1458
        %vm1460 = vweird.f32 %v1253
        %vm1461 = vweird.f32 %v1454
        %vm1462 = vmor %vm1460, %vm1461
        %v1463 = vsel %vm1462, %v1454, %v1459
        %v1464 = vrsqrt.pop %v1254
        %v1465 = vmul.f32 %v1464, %v1254
        %v1466 = vmul.f32 %v1465, %v1464
        %v1467 = vmul.f32 0.5, %v1466
        %v1468 = vsub.f32 1.5, %v1467
        %v1469 = vmul.f32 %v1464, %v1468
        %vm1470 = vweird.f32 %v1254
        %vm1471 = vweird.f32 %v1464
        %vm1472 = vmor %vm1470, %vm1471
        %v1473 = vsel %vm1472, %v1464, %v1469
        %v1474 = vrsqrt.pop %v1255
        %v1475 = vmul.f32 %v1474, %v1255
        %v1476 = vmul.f32 %v1475, %v1474
        %v1477 = vmul.f32 0.5, %v1476
        %v1478 = vsub.f32 1.5, %v1477
        %v1479 = vmul.f32 %v1474, %v1478
        %vm1480 = vweird.f32 %v1255
        %vm1481 = vweird.f32 %v1474
        %vm1482 = vmor %vm1480, %vm1481
        %v1483 = vsel %vm1482, %v1474, %v1479
        %v1484 = vrsqrt.pop %v1256
        %v1485 = vmul.f32 %v1484, %v1256
        %v1486 = vmul.f32 %v1485, %v1484
        %v1487 = vmul.f32 0.5, %v1486
        %v1488 = vsub.f32 1.5, %v1487
        %v1489 = vmul.f32 %v1484, %v1488
        %vm1490 = vweird.f32 %v1256
        %vm1491 = vweird.f32 %v1484
        %vm1492 = vmor %vm1490, %vm1491
        %v1493 = vsel %vm1492, %v1484, %v1489
        %v1494 = vrsqrt.pop %v1257
        %v1495 = vmul.f32 %v1494, %v1257
        %v1496 = vmul.f32 %v1495, %v1494
        %v1497 = vmul.f32 0.5, %v1496
        %v1498 = vsub.f32 1.5, %v1497
        %v1499 = vmul.f32 %v1494, %v1498
        %vm1500 = vweird.f32 %v1257
        %vm1501 = vweird.f32 %v1494
        %vm1502 = vmor %vm1500, %vm1501
        %v1503 = vsel %vm1502, %v1494, %v1499
        %v1504 = vrsqrt.pop %v1258
        %v1505 = vmul.f32 %v1504, %v1258
        %v1506 = vmul.f32 %v1505, %v1504
        %v1507 = vmul.f32 0.5, %v1506
        %v1508 = vsub.f32 1.5, %v1507
        %v1509 = vmul.f32 %v1504, %v1508
        %vm1510 = vweird.f32 %v1258
        %vm1511 = vweird.f32 %v1504
        %vm1512 = vmor %vm1510, %vm1511
        %v1513 = vsel %vm1512, %v1504, %v1509
        %v1514 = vrsqrt.pop %v1259
        %v1515 = vmul.f32 %v1514, %v1259
        %v1516 = vmul.f32 %v1515, %v1514
        %v1517 = vmul.f32 0.5, %v1516
        %v1518 = vsub.f32 1.5, %v1517
        %v1519 = vmul.f32 %v1514, %v1518
        %vm1520 = vweird.f32 %v1259
        %vm1521 = vweird.f32 %v1514
        %vm1522 = vmor %vm1520, %vm1521
        %v1523 = vsel %vm1522, %v1514, %v1519
        %v1524 = vrsqrt.pop %v1260
        %v1525 = vmul.f32 %v1524, %v1260
        %v1526 = vmul.f32 %v1525, %v1524
        %v1527 = vmul.f32 0.5, %v1526
        %v1528 = vsub.f32 1.5, %v1527
        %v1529 = vmul.f32 %v1524, %v1528
        %vm1530 = vweird.f32 %v1260
        %vm1531 = vweird.f32 %v1524
        %vm1532 = vmor %vm1530, %vm1531
        %v1533 = vsel %vm1532, %v1524, %v1529
        %v1534 = vrsqrt.pop %v1261
        %v1535 = vmul.f32 %v1534, %v1261
        %v1536 = vmul.f32 %v1535, %v1534
        %v1537 = vmul.f32 0.5, %v1536
        %v1538 = vsub.f32 1.5, %v1537
        %v1539 = vmul.f32 %v1534, %v1538
        %vm1540 = vweird.f32 %v1261
        %vm1541 = vweird.f32 %v1534
        %vm1542 = vmor %vm1540, %vm1541
        %v1543 = vsel %vm1542, %v1534, %v1539
        %v1544 = vrsqrt.pop %v1262
        %v1545 = vmul.f32 %v1544, %v1262
        %v1546 = vmul.f32 %v1545, %v1544
        %v1547 = vmul.f32 0.5, %v1546
        %v1548 = vsub.f32 1.5, %v1547
        %v1549 = vmul.f32 %v1544, %v1548
        %vm1550 = vweird.f32 %v1262
        %vm1551 = vweird.f32 %v1544
        %vm1552 = vmor %vm1550, %vm1551
        %v1553 = vsel %vm1552, %v1544, %v1549
        %v1554 = vrsqrt.pop %v1263
        %v1555 = vmul.f32 %v1554, %v1263
        %v1556 = vmul.f32 %v1555, %v1554
        %v1557 = vmul.f32 0.5, %v1556
        %v1558 = vsub.f32 1.5, %v1557
        %v1559 = vmul.f32 %v1554, %v1558
        %vm1560 = vweird.f32 %v1263
        %vm1561 = vweird.f32 %v1554
        %vm1562 = vmor %vm1560, %vm1561
        %v1563 = vsel %vm1562, %v1554, %v1559
        %v1564 = vrsqrt.pop %v1264
        %v1565 = vmul.f32 %v1564, %v1264
        %v1566 = vmul.f32 %v1565, %v1564
        %v1567 = vmul.f32 0.5, %v1566
        %v1568 = vsub.f32 1.5, %v1567
        %v1569 = vmul.f32 %v1564, %v1568
        %vm1570 = vweird.f32 %v1264
        %vm1571 = vweird.f32 %v1564
        %vm1572 = vmor %vm1570, %vm1571
        %v1573 = vsel %vm1572, %v1564, %v1569
        %v1574 = vrsqrt.pop %v1265
        %v1575 = vmul.f32 %v1574, %v1265
        %v1576 = vmul.f32 %v1575, %v1574
        %v1577 = vmul.f32 0.5, %v1576
        %v1578 = vsub.f32 1.5, %v1577
        %v1579 = vmul.f32 %v1574, %v1578
        %vm1580 = vweird.f32 %v1265
        %vm1581 = vweird.f32 %v1574
        %vm1582 = vmor %vm1580, %vm1581
        %v1583 = vsel %vm1582, %v1574, %v1579
        %v1584 = vrsqrt.pop %v1266
        %v1585 = vmul.f32 %v1584, %v1266
        %v1586 = vmul.f32 %v1585, %v1584
        %v1587 = vmul.f32 0.5, %v1586
        %v1588 = vsub.f32 1.5, %v1587
        %v1589 = vmul.f32 %v1584, %v1588
        %vm1590 = vweird.f32 %v1266
        %vm1591 = vweird.f32 %v1584
        %vm1592 = vmor %vm1590, %vm1591
        %v1593 = vsel %vm1592, %v1584, %v1589
        %v1594 = vrsqrt.pop %v1267
        %v1595 = vmul.f32 %v1594, %v1267
        %v1596 = vmul.f32 %v1595, %v1594
        %v1597 = vmul.f32 0.5, %v1596
        %v1598 = vsub.f32 1.5, %v1597
        %v1599 = vmul.f32 %v1594, %v1598
        %vm1600 = vweird.f32 %v1267
        %vm1601 = vweird.f32 %v1594
        %vm1602 = vmor %vm1600, %vm1601
        %v1603 = vsel %vm1602, %v1594, %v1599
        %v1604 = vrsqrt.pop %v1268
        %v1605 = vmul.f32 %v1604, %v1268
        %v1606 = vmul.f32 %v1605, %v1604
        %v1607 = vmul.f32 0.5, %v1606
        %v1608 = vsub.f32 1.5, %v1607
        %v1609 = vmul.f32 %v1604, %v1608
        %vm1610 = vweird.f32 %v1268
        %vm1611 = vweird.f32 %v1604
        %vm1612 = vmor %vm1610, %vm1611
        %v1613 = vsel %vm1612, %v1604, %v1609
        %v1614 = vrsqrt.pop %v1269
        %v1615 = vmul.f32 %v1614, %v1269
        %v1616 = vmul.f32 %v1615, %v1614
        %v1617 = vmul.f32 0.5, %v1616
        %v1618 = vsub.f32 1.5, %v1617
        %v1619 = vmul.f32 %v1614, %v1618
        %vm1620 = vweird.f32 %v1269
        %vm1621 = vweird.f32 %v1614
        %vm1622 = vmor %vm1620, %vm1621
        %v1623 = vsel %vm1622, %v1614, %v1619
        %v1624 = vrsqrt.pop %v1270
        %v1625 = vmul.f32 %v1624, %v1270
        %v1626 = vmul.f32 %v1625, %v1624
        %v1627 = vmul.f32 0.5, %v1626
        %v1628 = vsub.f32 1.5, %v1627
        %v1629 = vmul.f32 %v1624, %v1628
        %vm1630 = vweird.f32 %v1270
        %vm1631 = vweird.f32 %v1624
        %vm1632 = vmor %vm1630, %vm1631
        %v1633 = vsel %vm1632, %v1624, %v1629
        %v1634 = vrsqrt.pop %v1271
        %v1635 = vmul.f32 %v1634, %v1271
        %v1636 = vmul.f32 %v1635, %v1634
        %v1637 = vmul.f32 0.5, %v1636
        %v1638 = vsub.f32 1.5, %v1637
        %v1639 = vmul.f32 %v1634, %v1638
        %vm1640 = vweird.f32 %v1271
        %vm1641 = vweird.f32 %v1634
        %vm1642 = vmor %vm1640, %vm1641
        %v1643 = vsel %vm1642, %v1634, %v1639
        %v1644 = vrsqrt.pop %v1272
        %v1645 = vmul.f32 %v1644, %v1272
        %v1646 = vmul.f32 %v1645, %v1644
        %v1647 = vmul.f32 0.5, %v1646
        %v1648 = vsub.f32 1.5, %v1647
        %v1649 = vmul.f32 %v1644, %v1648
        %vm1650 = vweird.f32 %v1272
        %vm1651 = vweird.f32 %v1644
        %vm1652 = vmor %vm1650, %vm1651
        %v1653 = vsel %vm1652, %v1644, %v1649
        %v1654 = vrsqrt.pop %v1273
        %v1655 = vmul.f32 %v1654, %v1273
        %v1656 = vmul.f32 %v1655, %v1654
        %v1657 = vmul.f32 0.5, %v1656
        %v1658 = vsub.f32 1.5, %v1657
        %v1659 = vmul.f32 %v1654, %v1658
        %vm1660 = vweird.f32 %v1273
        %vm1661 = vweird.f32 %v1654
        %vm1662 = vmor %vm1660, %vm1661
        %v1663 = vsel %vm1662, %v1654, %v1659
        %v1664 = vrsqrt.pop %v1274
        %v1665 = vmul.f32 %v1664, %v1274
        %v1666 = vmul.f32 %v1665, %v1664
        %v1667 = vmul.f32 0.5, %v1666
        %v1668 = vsub.f32 1.5, %v1667
        %v1669 = vmul.f32 %v1664, %v1668
        %vm1670 = vweird.f32 %v1274
        %vm1671 = vweird.f32 %v1664
        %vm1672 = vmor %vm1670, %vm1671
        %v1673 = vsel %vm1672, %v1664, %v1669
        %v1674 = vrsqrt.pop %v1275
        %v1675 = vmul.f32 %v1674, %v1275
        %v1676 = vmul.f32 %v1675, %v1674
        %v1677 = vmul.f32 0.5, %v1676
        %v1678 = vsub.f32 1.5, %v1677
        %v1679 = vmul.f32 %v1674, %v1678
        %vm1680 = vweird.f32 %v1275
        %vm1681 = vweird.f32 %v1674
        %vm1682 = vmor %vm1680, %vm1681
        %v1683 = vsel %vm1682, %v1674, %v1679
        %v1684 = vrsqrt.pop %v1276
        %v1685 = vmul.f32 %v1684, %v1276
        %v1686 = vmul.f32 %v1685, %v1684
        %v1687 = vmul.f32 0.5, %v1686
        %v1688 = vsub.f32 1.5, %v1687
        %v1689 = vmul.f32 %v1684, %v1688
        %vm1690 = vweird.f32 %v1276
        %vm1691 = vweird.f32 %v1684
        %vm1692 = vmor %vm1690, %vm1691
        %v1693 = vsel %vm1692, %v1684, %v1689
        %v1694 = vrsqrt.pop %v1277
        %v1695 = vmul.f32 %v1694, %v1277
        %v1696 = vmul.f32 %v1695, %v1694
        %v1697 = vmul.f32 0.5, %v1696
        %v1698 = vsub.f32 1.5, %v1697
        %v1699 = vmul.f32 %v1694, %v1698
        %vm1700 = vweird.f32 %v1277
        %vm1701 = vweird.f32 %v1694
        %vm1702 = vmor %vm1700, %vm1701
        %v1703 = vsel %vm1702, %v1694, %v1699
        %v1704 = vrsqrt.pop %v1278
        %v1705 = vmul.f32 %v1704, %v1278
        %v1706 = vmul.f32 %v1705, %v1704
        %v1707 = vmul.f32 0.5, %v1706
        %v1708 = vsub.f32 1.5, %v1707
        %v1709 = vmul.f32 %v1704, %v1708
        %vm1710 = vweird.f32 %v1278
        %vm1711 = vweird.f32 %v1704
        %vm1712 = vmor %vm1710, %vm1711
        %v1713 = vsel %vm1712, %v1704, %v1709
        %v1714 = vrsqrt.pop %v1279
        %v1715 = vmul.f32 %v1714, %v1279
        %v1716 = vmul.f32 %v1715, %v1714
        %v1717 = vmul.f32 0.5, %v1716
        %v1718 = vsub.f32 1.5, %v1717
        %v1719 = vmul.f32 %v1714, %v1718
        %vm1720 = vweird.f32 %v1279
        %vm1721 = vweird.f32 %v1714
        %vm1722 = vmor %vm1720, %vm1721
        %v1723 = vsel %vm1722, %v1714, %v1719
        %v1724 = vrsqrt.pop %v1280
        %v1725 = vmul.f32 %v1724, %v1280
        %v1726 = vmul.f32 %v1725, %v1724
        %v1727 = vmul.f32 0.5, %v1726
        %v1728 = vsub.f32 1.5, %v1727
        %v1729 = vmul.f32 %v1724, %v1728
        %vm1730 = vweird.f32 %v1280
        %vm1731 = vweird.f32 %v1724
        %vm1732 = vmor %vm1730, %vm1731
        %v1733 = vsel %vm1732, %v1724, %v1729
        %v1734 = vrsqrt.pop %v1281
        %v1735 = vmul.f32 %v1734, %v1281
        %v1736 = vmul.f32 %v1735, %v1734
        %v1737 = vmul.f32 0.5, %v1736
        %v1738 = vsub.f32 1.5, %v1737
        %v1739 = vmul.f32 %v1734, %v1738
        %vm1740 = vweird.f32 %v1281
        %vm1741 = vweird.f32 %v1734
        %vm1742 = vmor %vm1740, %vm1741
        %v1743 = vsel %vm1742, %v1734, %v1739
        %v1744 = vrsqrt.pop %v1282
        %v1745 = vmul.f32 %v1744, %v1282
        %v1746 = vmul.f32 %v1745, %v1744
        %v1747 = vmul.f32 0.5, %v1746
        %v1748 = vsub.f32 1.5, %v1747
        %v1749 = vmul.f32 %v1744, %v1748
        %vm1750 = vweird.f32 %v1282
        %vm1751 = vweird.f32 %v1744
        %vm1752 = vmor %vm1750, %vm1751
        %v1753 = vsel %vm1752, %v1744, %v1749
        %v1754 = vrsqrt.pop %v1283
        %v1755 = vmul.f32 %v1754, %v1283
        %v1756 = vmul.f32 %v1755, %v1754
        %v1757 = vmul.f32 0.5, %v1756
        %v1758 = vsub.f32 1.5, %v1757
        %v1759 = vmul.f32 %v1754, %v1758
        %vm1760 = vweird.f32 %v1283
        %vm1761 = vweird.f32 %v1754
        %vm1762 = vmor %vm1760, %vm1761
        %v1763 = vsel %vm1762, %v1754, %v1759
        %v1764 = vmul.f32 %v1188, %v1293
        %v1765 = vmul.f32 %v1189, %v1303
        %v1766 = vmul.f32 %v1190, %v1313
        %v1767 = vmul.f32 %v1191, %v1323
        %v1768 = vmul.f32 %v1192, %v1333
        %v1769 = vmul.f32 %v1193, %v1343
        %v1770 = vmul.f32 %v1194, %v1353
        %v1771 = vmul.f32 %v1195, %v1363
        %v1772 = vmul.f32 %v1196, %v1373
        %v1773 = vmul.f32 %v1197, %v1383
        %v1774 = vmul.f32 %v1198, %v1393
        %v1775 = vmul.f32 %v1199, %v1403
        %v1776 = vmul.f32 %v1200, %v1413
        %v1777 = vmul.f32 %v1201, %v1423
        %v1778 = vmul.f32 %v1202, %v1433
        %v1779 = vmul.f32 %v1203, %v1443
        %v1780 = vmul.f32 %v1204, %v1453
        %v1781 = vmul.f32 %v1205, %v1463
        %v1782 = vmul.f32 %v1206, %v1473
        %v1783 = vmul.f32 %v1207, %v1483
        %v1784 = vmul.f32 %v1208, %v1493
        %v1785 = vmul.f32 %v1209, %v1503
        %v1786 = vmul.f32 %v1210, %v1513
        %v1787 = vmul.f32 %v1211, %v1523
        %v1788 = vmul.f32 %v1212, %v1533
        %v1789 = vmul.f32 %v1213, %v1543
        %v1790 = vmul.f32 %v1214, %v1553
        %v1791 = vmul.f32 %v1215, %v1563
        %v1792 = vmul.f32 %v1216, %v1573
        %v1793 = vmul.f32 %v1217, %v1583
        %v1794 = vmul.f32 %v1218, %v1593
        %v1795 = vmul.f32 %v1219, %v1603
        %v1796 = vmul.f32 %v1220, %v1613
        %v1797 = vmul.f32 %v1221, %v1623
        %v1798 = vmul.f32 %v1222, %v1633
        %v1799 = vmul.f32 %v1223, %v1643
        %v1800 = vmul.f32 %v1224, %v1653
        %v1801 = vmul.f32 %v1225, %v1663
        %v1802 = vmul.f32 %v1226, %v1673
        %v1803 = vmul.f32 %v1227, %v1683
        %v1804 = vmul.f32 %v1228, %v1693
        %v1805 = vmul.f32 %v1229, %v1703
        %v1806 = vmul.f32 %v1230, %v1713
        %v1807 = vmul.f32 %v1231, %v1723
        %v1808 = vmul.f32 %v1232, %v1733
        %v1809 = vmul.f32 %v1233, %v1743
        %v1810 = vmul.f32 %v1234, %v1753
        %v1811 = vmul.f32 %v1235, %v1763
        %v1812 = vld [vmem:[%s3] sm:$0x1]
        %v1814 = vperm.slane %v1812, 0
        %v1816 = vmul.f32 %v1764, %v1814
        %v1817 = vmul.f32 %v1765, %v1814
        %v1818 = vmul.f32 %v1766, %v1814
        %v1819 = vmul.f32 %v1767, %v1814
        %v1820 = vmul.f32 %v1768, %v1814
        %v1821 = vmul.f32 %v1769, %v1814
        %v1822 = vmul.f32 %v1770, %v1814
        %v1823 = vmul.f32 %v1771, %v1814
        %v1824 = vmul.f32 %v1772, %v1814
        %v1825 = vmul.f32 %v1773, %v1814
        %v1826 = vmul.f32 %v1774, %v1814
        %v1827 = vmul.f32 %v1775, %v1814
        %v1828 = vmul.f32 %v1776, %v1814
        %v1829 = vmul.f32 %v1777, %v1814
        %v1830 = vmul.f32 %v1778, %v1814
        %v1831 = vmul.f32 %v1779, %v1814
        %v1832 = vmul.f32 %v1780, %v1814
        %v1833 = vmul.f32 %v1781, %v1814
        %v1834 = vmul.f32 %v1782, %v1814
        %v1835 = vmul.f32 %v1783, %v1814
        %v1836 = vmul.f32 %v1784, %v1814
        %v1837 = vmul.f32 %v1785, %v1814
        %v1838 = vmul.f32 %v1786, %v1814
        %v1839 = vmul.f32 %v1787, %v1814
        %v1840 = vmul.f32 %v1788, %v1814
        %v1841 = vmul.f32 %v1789, %v1814
        %v1842 = vmul.f32 %v1790, %v1814
        %v1843 = vmul.f32 %v1791, %v1814
        %v1844 = vmul.f32 %v1792, %v1814
        %v1845 = vmul.f32 %v1793, %v1814
        %v1846 = vmul.f32 %v1794, %v1814
        %v1847 = vmul.f32 %v1795, %v1814
        %v1848 = vmul.f32 %v1796, %v1814
        %v1849 = vmul.f32 %v1797, %v1814
        %v1850 = vmul.f32 %v1798, %v1814
        %v1851 = vmul.f32 %v1799, %v1814
        %v1852 = vmul.f32 %v1800, %v1814
        %v1853 = vmul.f32 %v1801, %v1814
        %v1854 = vmul.f32 %v1802, %v1814
        %v1855 = vmul.f32 %v1803, %v1814
        %v1856 = vmul.f32 %v1804, %v1814
        %v1857 = vmul.f32 %v1805, %v1814
        %v1858 = vmul.f32 %v1806, %v1814
        %v1859 = vmul.f32 %v1807, %v1814
        %v1860 = vmul.f32 %v1808, %v1814
        %v1861 = vmul.f32 %v1809, %v1814
        %v1862 = vmul.f32 %v1810, %v1814
        %v1863 = vmul.f32 %v1811, %v1814
        %v1864 = vld [vmem:[%s4] sm:$0x1]
        %v1866 = vperm.slane %v1864, 0
        %v1868 = vadd.f32 %v1816, %v1866
        %v1869 = vadd.f32 %v1817, %v1866
        %v1870 = vadd.f32 %v1818, %v1866
        %v1871 = vadd.f32 %v1819, %v1866
        %v1872 = vadd.f32 %v1820, %v1866
        %v1873 = vadd.f32 %v1821, %v1866
        %v1874 = vadd.f32 %v1822, %v1866
        %v1875 = vadd.f32 %v1823, %v1866
        %v1876 = vadd.f32 %v1824, %v1866
        %v1877 = vadd.f32 %v1825, %v1866
        %v1878 = vadd.f32 %v1826, %v1866
        %v1879 = vadd.f32 %v1827, %v1866
        %v1880 = vadd.f32 %v1828, %v1866
        %v1881 = vadd.f32 %v1829, %v1866
        %v1882 = vadd.f32 %v1830, %v1866
        %v1883 = vadd.f32 %v1831, %v1866
        %v1884 = vadd.f32 %v1832, %v1866
        %v1885 = vadd.f32 %v1833, %v1866
        %v1886 = vadd.f32 %v1834, %v1866
        %v1887 = vadd.f32 %v1835, %v1866
        %v1888 = vadd.f32 %v1836, %v1866
        %v1889 = vadd.f32 %v1837, %v1866
        %v1890 = vadd.f32 %v1838, %v1866
        %v1891 = vadd.f32 %v1839, %v1866
        %v1892 = vadd.f32 %v1840, %v1866
        %v1893 = vadd.f32 %v1841, %v1866
        %v1894 = vadd.f32 %v1842, %v1866
        %v1895 = vadd.f32 %v1843, %v1866
        %v1896 = vadd.f32 %v1844, %v1866
        %v1897 = vadd.f32 %v1845, %v1866
        %v1898 = vadd.f32 %v1846, %v1866
        %v1899 = vadd.f32 %v1847, %v1866
        %v1900 = vadd.f32 %v1848, %v1866
        %v1901 = vadd.f32 %v1849, %v1866
        %v1902 = vadd.f32 %v1850, %v1866
        %v1903 = vadd.f32 %v1851, %v1866
        %v1904 = vadd.f32 %v1852, %v1866
        %v1905 = vadd.f32 %v1853, %v1866
        %v1906 = vadd.f32 %v1854, %v1866
        %v1907 = vadd.f32 %v1855, %v1866
        %v1908 = vadd.f32 %v1856, %v1866
        %v1909 = vadd.f32 %v1857, %v1866
        %v1910 = vadd.f32 %v1858, %v1866
        %v1911 = vadd.f32 %v1859, %v1866
        %v1912 = vadd.f32 %v1860, %v1866
        %v1913 = vadd.f32 %v1861, %v1866
        %v1914 = vadd.f32 %v1862, %v1866
        %v1915 = vadd.f32 %v1863, %v1866
        %v1916 = vmax.f32 %v1868, 0.0
        %v1917 = vmax.f32 %v1869, 0.0
        %v1918 = vmax.f32 %v1870, 0.0
        %v1919 = vmax.f32 %v1871, 0.0
        %v1920 = vmax.f32 %v1872, 0.0
        %v1921 = vmax.f32 %v1873, 0.0
        %v1922 = vmax.f32 %v1874, 0.0
        %v1923 = vmax.f32 %v1875, 0.0
        %v1924 = vmax.f32 %v1876, 0.0
        %v1925 = vmax.f32 %v1877, 0.0
        %v1926 = vmax.f32 %v1878, 0.0
        %v1927 = vmax.f32 %v1879, 0.0
        %v1928 = vmax.f32 %v1880, 0.0
        %v1929 = vmax.f32 %v1881, 0.0
        %v1930 = vmax.f32 %v1882, 0.0
        %v1931 = vmax.f32 %v1883, 0.0
        %v1932 = vmax.f32 %v1884, 0.0
        %v1933 = vmax.f32 %v1885, 0.0
        %v1934 = vmax.f32 %v1886, 0.0
        %v1935 = vmax.f32 %v1887, 0.0
        %v1936 = vmax.f32 %v1888, 0.0
        %v1937 = vmax.f32 %v1889, 0.0
        %v1938 = vmax.f32 %v1890, 0.0
        %v1939 = vmax.f32 %v1891, 0.0
        %v1940 = vmax.f32 %v1892, 0.0
        %v1941 = vmax.f32 %v1893, 0.0
        %v1942 = vmax.f32 %v1894, 0.0
        %v1943 = vmax.f32 %v1895, 0.0
        %v1944 = vmax.f32 %v1896, 0.0
        %v1945 = vmax.f32 %v1897, 0.0
        %v1946 = vmax.f32 %v1898, 0.0
        %v1947 = vmax.f32 %v1899, 0.0
        %v1948 = vmax.f32 %v1900, 0.0
        %v1949 = vmax.f32 %v1901, 0.0
        %v1950 = vmax.f32 %v1902, 0.0
        %v1951 = vmax.f32 %v1903, 0.0
        %v1952 = vmax.f32 %v1904, 0.0
        %v1953 = vmax.f32 %v1905, 0.0
        %v1954 = vmax.f32 %v1906, 0.0
        %v1955 = vmax.f32 %v1907, 0.0
        %v1956 = vmax.f32 %v1908, 0.0
        %v1957 = vmax.f32 %v1909, 0.0
        %v1958 = vmax.f32 %v1910, 0.0
        %v1959 = vmax.f32 %v1911, 0.0
        %v1960 = vmax.f32 %v1912, 0.0
        %v1961 = vmax.f32 %v1913, 0.0
        %v1962 = vmax.f32 %v1914, 0.0
        %v1963 = vmax.f32 %v1915, 0.0
        %v1964 = vpack.c.bf16 %v1917, %v1916
        %v1965 = vpack.c.bf16 %v1919, %v1918
        %v1966 = vpack.c.bf16 %v1921, %v1920
        %v1967 = vpack.c.bf16 %v1923, %v1922
        %v1968 = vpack.c.bf16 %v1925, %v1924
        %v1969 = vpack.c.bf16 %v1927, %v1926
        %v1970 = vpack.c.bf16 %v1929, %v1928
        %v1971 = vpack.c.bf16 %v1931, %v1930
        %v1972 = vpack.c.bf16 %v1933, %v1932
        %v1973 = vpack.c.bf16 %v1935, %v1934
        %v1974 = vpack.c.bf16 %v1937, %v1936
        %v1975 = vpack.c.bf16 %v1939, %v1938
        %v1976 = vpack.c.bf16 %v1941, %v1940
        %v1977 = vpack.c.bf16 %v1943, %v1942
        %v1978 = vpack.c.bf16 %v1945, %v1944
        %v1979 = vpack.c.bf16 %v1947, %v1946
        %v1980 = vpack.c.bf16 %v1949, %v1948
        %v1981 = vpack.c.bf16 %v1951, %v1950
        %v1982 = vpack.c.bf16 %v1953, %v1952
        %v1983 = vpack.c.bf16 %v1955, %v1954
        %v1984 = vpack.c.bf16 %v1957, %v1956
        %v1985 = vpack.c.bf16 %v1959, %v1958
        %v1986 = vpack.c.bf16 %v1961, %v1960
        %v1987 = vpack.c.bf16 %v1963, %v1962
        %v1988 = vld [vmem:[%s5] sm:$0xff]
        %v1989 = vld [vmem:[%s5 + $0x8] sm:$0xff]
        %v1990 = vld [vmem:[%s5 + $0x10] sm:$0xff]
        %v1991 = vld [vmem:[%s5 + $0x18] sm:$0xff]
        %v1992 = vld [vmem:[%s5 + $0x20] sm:$0xff]
        %v1993 = vld [vmem:[%s5 + $0x28] sm:$0xff]
        %v1994 = vld [vmem:[%s5 + $0x30] sm:$0xff]
        %v1995 = vld [vmem:[%s5 + $0x38] sm:$0xff]
        %v1996 = vld [vmem:[%s5 + $0x40] sm:$0xff]
        %v1997 = vld [vmem:[%s5 + $0x48] sm:$0xff]
        %v1998 = vld [vmem:[%s5 + $0x50] sm:$0xff]
        %v1999 = vld [vmem:[%s5 + $0x58] sm:$0xff]
        %v2000 = vld [vmem:[%s5 + $0x60] sm:$0xff]
        %v2001 = vld [vmem:[%s5 + $0x68] sm:$0xff]
        %v2002 = vld [vmem:[%s5 + $0x70] sm:$0xff]
        %v2003 = vld [vmem:[%s5 + $0x78] sm:$0xff]
        %v2004 = vld [vmem:[%s6] sm:$0x3]
        %v2006 = vperm.slane %v2004, 0
        %v2007 = vperm.slane %v2004, 1
        %v2026 = vunpack.c.l.b16 %v1988
        %v2027 = vunpack.c.h.b16 %v1988
        %v2028 = vunpack.c.l.b16 %v1989
        %v2029 = vunpack.c.h.b16 %v1989
        %v2030 = vunpack.c.l.b16 %v1990
        %v2031 = vunpack.c.h.b16 %v1990
        %v2032 = vunpack.c.l.b16 %v1991
        %v2033 = vunpack.c.h.b16 %v1991
        %v2034 = vunpack.c.l.b16 %v1992
        %v2035 = vunpack.c.h.b16 %v1992
        %v2036 = vunpack.c.l.b16 %v1993
        %v2037 = vunpack.c.h.b16 %v1993
        %v2038 = vunpack.c.l.b16 %v1994
        %v2039 = vunpack.c.h.b16 %v1994
        %v2040 = vunpack.c.l.b16 %v1995
        %v2041 = vunpack.c.h.b16 %v1995
        %v2042 = vunpack.c.l.b16 %v1996
        %v2043 = vunpack.c.h.b16 %v1996
        %v2044 = vunpack.c.l.b16 %v1997
        %v2045 = vunpack.c.h.b16 %v1997
        %v2046 = vunpack.c.l.b16 %v1998
        %v2047 = vunpack.c.h.b16 %v1998
        %v2048 = vunpack.c.l.b16 %v1999
        %v2049 = vunpack.c.h.b16 %v1999
        %v2050 = vunpack.c.l.b16 %v2000
        %v2051 = vunpack.c.h.b16 %v2000
        %v2052 = vunpack.c.l.b16 %v2001
        %v2053 = vunpack.c.h.b16 %v2001
        %v2054 = vunpack.c.l.b16 %v2002
        %v2055 = vunpack.c.h.b16 %v2002
        %v2056 = vunpack.c.l.b16 %v2003
        %v2057 = vunpack.c.h.b16 %v2003
        %v2058 = vpack.c.b16 %v2028, %v2026
        %v2059 = vpack.c.b16 %v2029, %v2027
        %v2060 = vpack.c.b16 %v2032, %v2030
        %v2061 = vpack.c.b16 %v2033, %v2031
        %v2062 = vpack.c.b16 %v2036, %v2034
        %v2063 = vpack.c.b16 %v2037, %v2035
        %v2064 = vpack.c.b16 %v2040, %v2038
        %v2065 = vpack.c.b16 %v2041, %v2039
        %v2066 = vpack.c.b16 %v2044, %v2042
        %v2067 = vpack.c.b16 %v2045, %v2043
        %v2068 = vpack.c.b16 %v2048, %v2046
        %v2069 = vpack.c.b16 %v2049, %v2047
        %v2070 = vpack.c.b16 %v2052, %v2050
        %v2071 = vpack.c.b16 %v2053, %v2051
        %v2072 = vpack.c.b16 %v2056, %v2054
        %v2073 = vpack.c.b16 %v2057, %v2055
        %2090 = vmatpush.bf16.msra.mxu0 %v2072
        %2091 = vmatpush.bf16.msra.mxu0 %v2070
        %2092 = vmatpush.bf16.msra.mxu0 %v2068
        %2093 = vmatpush.bf16.msra.mxu0 %v2066
        %2094 = vmatpush.bf16.msra.mxu0 %v2064
        %2095 = vmatpush.bf16.msra.mxu0 %v2062
        %2096 = vmatpush.bf16.msra.mxu0 %v2060
        %2097 = vmatpush.bf16.msra.mxu0 %v2058
        %2098 = vmatmul.bf16.gmra.mxu0 %v1964
        %v2099 = vpop.f32.mrf.mxu0
        %v2100 = vadd.f32 %v2006, %v2099
        %v2101 = vpop.f32.mrf.mxu0
        %v2102 = vadd.f32 %v2006, %v2101
        %2103 = vmatmul.bf16.gmra.mxu0 %v1965
        %v2104 = vpop.f32.mrf.mxu0
        %v2105 = vadd.f32 %v2006, %v2104
        %v2106 = vpop.f32.mrf.mxu0
        %v2107 = vadd.f32 %v2006, %v2106
        %2108 = vmatmul.bf16.gmra.mxu0 %v1966
        %v2109 = vpop.f32.mrf.mxu0
        %v2110 = vadd.f32 %v2006, %v2109
        %v2111 = vpop.f32.mrf.mxu0
        %v2112 = vadd.f32 %v2006, %v2111
        %2113 = vmatmul.bf16.gmra.mxu0 %v1967
        %v2114 = vpop.f32.mrf.mxu0
        %v2115 = vadd.f32 %v2006, %v2114
        %v2116 = vpop.f32.mrf.mxu0
        %v2117 = vadd.f32 %v2006, %v2116
        %2118 = vmatmul.bf16.gmra.mxu0 %v1968
        %v2119 = vpop.f32.mrf.mxu0
        %v2120 = vadd.f32 %v2006, %v2119
        %v2121 = vpop.f32.mrf.mxu0
        %v2122 = vadd.f32 %v2006, %v2121
        %2123 = vmatmul.bf16.gmra.mxu0 %v1969
        %v2124 = vpop.f32.mrf.mxu0
        %v2125 = vadd.f32 %v2006, %v2124
        %v2126 = vpop.f32.mrf.mxu0
        %v2127 = vadd.f32 %v2006, %v2126
        %2128 = vmatmul.bf16.gmra.mxu0 %v1970
        %v2129 = vpop.f32.mrf.mxu0
        %v2130 = vadd.f32 %v2006, %v2129
        %v2131 = vpop.f32.mrf.mxu0
        %v2132 = vadd.f32 %v2006, %v2131
        %2133 = vmatmul.bf16.gmra.mxu0 %v1971
        %v2134 = vpop.f32.mrf.mxu0
        %v2135 = vadd.f32 %v2006, %v2134
        %v2136 = vpop.f32.mrf.mxu0
        %v2137 = vadd.f32 %v2006, %v2136
        %2138 = vmatmul.bf16.gmra.mxu0 %v1972
        %v2139 = vpop.f32.mrf.mxu0
        %v2140 = vadd.f32 %v2006, %v2139
        %v2141 = vpop.f32.mrf.mxu0
        %v2142 = vadd.f32 %v2006, %v2141
        %2143 = vmatmul.bf16.gmra.mxu0 %v1973
        %v2144 = vpop.f32.mrf.mxu0
        %v2145 = vadd.f32 %v2006, %v2144
        %v2146 = vpop.f32.mrf.mxu0
        %v2147 = vadd.f32 %v2006, %v2146
        %2148 = vmatmul.bf16.gmra.mxu0 %v1974
        %v2149 = vpop.f32.mrf.mxu0
        %v2150 = vadd.f32 %v2006, %v2149
        %v2151 = vpop.f32.mrf.mxu0
        %v2152 = vadd.f32 %v2006, %v2151
        %2153 = vmatmul.bf16.gmra.mxu0 %v1975
        %v2154 = vpop.f32.mrf.mxu0
        %v2155 = vadd.f32 %v2006, %v2154
        %v2156 = vpop.f32.mrf.mxu0
        %v2157 = vadd.f32 %v2006, %v2156
        %2158 = vmatmul.bf16.gmra.mxu0 %v1976
        %v2159 = vpop.f32.mrf.mxu0
        %v2160 = vadd.f32 %v2006, %v2159
        %v2161 = vpop.f32.mrf.mxu0
        %v2162 = vadd.f32 %v2006, %v2161
        %2163 = vmatmul.bf16.gmra.mxu0 %v1977
        %v2164 = vpop.f32.mrf.mxu0
        %v2165 = vadd.f32 %v2006, %v2164
        %v2166 = vpop.f32.mrf.mxu0
        %v2167 = vadd.f32 %v2006, %v2166
        %2168 = vmatmul.bf16.gmra.mxu0 %v1978
        %v2169 = vpop.f32.mrf.mxu0
        %v2170 = vadd.f32 %v2006, %v2169
        %v2171 = vpop.f32.mrf.mxu0
        %v2172 = vadd.f32 %v2006, %v2171
        %2173 = vmatmul.bf16.gmra.mxu0 %v1979
        %v2174 = vpop.f32.mrf.mxu0
        %v2175 = vadd.f32 %v2006, %v2174
        %v2176 = vpop.f32.mrf.mxu0
        %v2177 = vadd.f32 %v2006, %v2176
        %2178 = vmatmul.bf16.gmra.mxu0 %v1980
        %v2179 = vpop.f32.mrf.mxu0
        %v2180 = vadd.f32 %v2006, %v2179
        %v2181 = vpop.f32.mrf.mxu0
        %v2182 = vadd.f32 %v2006, %v2181
        %2183 = vmatmul.bf16.gmra.mxu0 %v1981
        %v2184 = vpop.f32.mrf.mxu0
        %v2185 = vadd.f32 %v2006, %v2184
        %v2186 = vpop.f32.mrf.mxu0
        %v2187 = vadd.f32 %v2006, %v2186
        %2188 = vmatmul.bf16.gmra.mxu0 %v1982
        %v2189 = vpop.f32.mrf.mxu0
        %v2190 = vadd.f32 %v2006, %v2189
        %v2191 = vpop.f32.mrf.mxu0
        %v2192 = vadd.f32 %v2006, %v2191
        %2193 = vmatmul.bf16.gmra.mxu0 %v1983
        %v2194 = vpop.f32.mrf.mxu0
        %v2195 = vadd.f32 %v2006, %v2194
        %v2196 = vpop.f32.mrf.mxu0
        %v2197 = vadd.f32 %v2006, %v2196
        %2198 = vmatmul.bf16.gmra.mxu0 %v1984
        %v2199 = vpop.f32.mrf.mxu0
        %v2200 = vadd.f32 %v2006, %v2199
        %v2201 = vpop.f32.mrf.mxu0
        %v2202 = vadd.f32 %v2006, %v2201
        %2203 = vmatmul.bf16.gmra.mxu0 %v1985
        %v2204 = vpop.f32.mrf.mxu0
        %v2205 = vadd.f32 %v2006, %v2204
        %v2206 = vpop.f32.mrf.mxu0
        %v2207 = vadd.f32 %v2006, %v2206
        %2208 = vmatmul.bf16.gmra.mxu0 %v1986
        %v2209 = vpop.f32.mrf.mxu0
        %v2210 = vadd.f32 %v2006, %v2209
        %v2211 = vpop.f32.mrf.mxu0
        %v2212 = vadd.f32 %v2006, %v2211
        %2213 = vmatmul.bf16.gmra.mxu0 %v1987
        %v2214 = vpop.f32.mrf.mxu0
        %v2215 = vadd.f32 %v2006, %v2214
        %v2216 = vpop.f32.mrf.mxu0
        %v2217 = vadd.f32 %v2006, %v2216
        %2218 = vdwg.mxu0
        %2219 = vmatpush.bf16.msra.mxu0 %v2073
        %2220 = vmatpush.bf16.msra.mxu0 %v2071
        %2221 = vmatpush.bf16.msra.mxu0 %v2069
        %2222 = vmatpush.bf16.msra.mxu0 %v2067
        %2223 = vmatpush.bf16.msra.mxu0 %v2065
        %2224 = vmatpush.bf16.msra.mxu0 %v2063
        %2225 = vmatpush.bf16.msra.mxu0 %v2061
        %2226 = vmatpush.bf16.msra.mxu0 %v2059
        %2227 = vmatmul.bf16.gmra.mxu0 %v1964
        %v2228 = vpop.f32.mrf.mxu0
        %v2229 = vadd.f32 %v2007, %v2228
        %v2230 = vpop.f32.mrf.mxu0
        %v2231 = vadd.f32 %v2007, %v2230
        %2232 = vmatmul.bf16.gmra.mxu0 %v1965
        %v2233 = vpop.f32.mrf.mxu0
        %v2234 = vadd.f32 %v2007, %v2233
        %v2235 = vpop.f32.mrf.mxu0
        %v2236 = vadd.f32 %v2007, %v2235
        %2237 = vmatmul.bf16.gmra.mxu0 %v1966
        %v2238 = vpop.f32.mrf.mxu0
        %v2239 = vadd.f32 %v2007, %v2238
        %v2240 = vpop.f32.mrf.mxu0
        %v2241 = vadd.f32 %v2007, %v2240
        %2242 = vmatmul.bf16.gmra.mxu0 %v1967
        %v2243 = vpop.f32.mrf.mxu0
        %v2244 = vadd.f32 %v2007, %v2243
        %v2245 = vpop.f32.mrf.mxu0
        %v2246 = vadd.f32 %v2007, %v2245
        %2247 = vmatmul.bf16.gmra.mxu0 %v1968
        %v2248 = vpop.f32.mrf.mxu0
        %v2249 = vadd.f32 %v2007, %v2248
        %v2250 = vpop.f32.mrf.mxu0
        %v2251 = vadd.f32 %v2007, %v2250
        %2252 = vmatmul.bf16.gmra.mxu0 %v1969
        %v2253 = vpop.f32.mrf.mxu0
        %v2254 = vadd.f32 %v2007, %v2253
        %v2255 = vpop.f32.mrf.mxu0
        %v2256 = vadd.f32 %v2007, %v2255
        %2257 = vmatmul.bf16.gmra.mxu0 %v1970
        %v2258 = vpop.f32.mrf.mxu0
        %v2259 = vadd.f32 %v2007, %v2258
        %v2260 = vpop.f32.mrf.mxu0
        %v2261 = vadd.f32 %v2007, %v2260
        %2262 = vmatmul.bf16.gmra.mxu0 %v1971
        %v2263 = vpop.f32.mrf.mxu0
        %v2264 = vadd.f32 %v2007, %v2263
        %v2265 = vpop.f32.mrf.mxu0
        %v2266 = vadd.f32 %v2007, %v2265
        %2267 = vmatmul.bf16.gmra.mxu0 %v1972
        %v2268 = vpop.f32.mrf.mxu0
        %v2269 = vadd.f32 %v2007, %v2268
        %v2270 = vpop.f32.mrf.mxu0
        %v2271 = vadd.f32 %v2007, %v2270
        %2272 = vmatmul.bf16.gmra.mxu0 %v1973
        %v2273 = vpop.f32.mrf.mxu0
        %v2274 = vadd.f32 %v2007, %v2273
        %v2275 = vpop.f32.mrf.mxu0
        %v2276 = vadd.f32 %v2007, %v2275
        %2277 = vmatmul.bf16.gmra.mxu0 %v1974
        %v2278 = vpop.f32.mrf.mxu0
        %v2279 = vadd.f32 %v2007, %v2278
        %v2280 = vpop.f32.mrf.mxu0
        %v2281 = vadd.f32 %v2007, %v2280
        %2282 = vmatmul.bf16.gmra.mxu0 %v1975
        %v2283 = vpop.f32.mrf.mxu0
        %v2284 = vadd.f32 %v2007, %v2283
        %v2285 = vpop.f32.mrf.mxu0
        %v2286 = vadd.f32 %v2007, %v2285
        %2287 = vmatmul.bf16.gmra.mxu0 %v1976
        %v2288 = vpop.f32.mrf.mxu0
        %v2289 = vadd.f32 %v2007, %v2288
        %v2290 = vpop.f32.mrf.mxu0
        %v2291 = vadd.f32 %v2007, %v2290
        %2292 = vmatmul.bf16.gmra.mxu0 %v1977
        %v2293 = vpop.f32.mrf.mxu0
        %v2294 = vadd.f32 %v2007, %v2293
        %v2295 = vpop.f32.mrf.mxu0
        %v2296 = vadd.f32 %v2007, %v2295
        %2297 = vmatmul.bf16.gmra.mxu0 %v1978
        %v2298 = vpop.f32.mrf.mxu0
        %v2299 = vadd.f32 %v2007, %v2298
        %v2300 = vpop.f32.mrf.mxu0
        %v2301 = vadd.f32 %v2007, %v2300
        %2302 = vmatmul.bf16.gmra.mxu0 %v1979
        %v2303 = vpop.f32.mrf.mxu0
        %v2304 = vadd.f32 %v2007, %v2303
        %v2305 = vpop.f32.mrf.mxu0
        %v2306 = vadd.f32 %v2007, %v2305
        %2307 = vmatmul.bf16.gmra.mxu0 %v1980
        %v2308 = vpop.f32.mrf.mxu0
        %v2309 = vadd.f32 %v2007, %v2308
        %v2310 = vpop.f32.mrf.mxu0
        %v2311 = vadd.f32 %v2007, %v2310
        %2312 = vmatmul.bf16.gmra.mxu0 %v1981
        %v2313 = vpop.f32.mrf.mxu0
        %v2314 = vadd.f32 %v2007, %v2313
        %v2315 = vpop.f32.mrf.mxu0
        %v2316 = vadd.f32 %v2007, %v2315
        %2317 = vmatmul.bf16.gmra.mxu0 %v1982
        %v2318 = vpop.f32.mrf.mxu0
        %v2319 = vadd.f32 %v2007, %v2318
        %v2320 = vpop.f32.mrf.mxu0
        %v2321 = vadd.f32 %v2007, %v2320
        %2322 = vmatmul.bf16.gmra.mxu0 %v1983
        %v2323 = vpop.f32.mrf.mxu0
        %v2324 = vadd.f32 %v2007, %v2323
        %v2325 = vpop.f32.mrf.mxu0
        %v2326 = vadd.f32 %v2007, %v2325
        %2327 = vmatmul.bf16.gmra.mxu0 %v1984
        %v2328 = vpop.f32.mrf.mxu0
        %v2329 = vadd.f32 %v2007, %v2328
        %v2330 = vpop.f32.mrf.mxu0
        %v2331 = vadd.f32 %v2007, %v2330
        %2332 = vmatmul.bf16.gmra.mxu0 %v1985
        %v2333 = vpop.f32.mrf.mxu0
        %v2334 = vadd.f32 %v2007, %v2333
        %v2335 = vpop.f32.mrf.mxu0
        %v2336 = vadd.f32 %v2007, %v2335
        %2337 = vmatmul.bf16.gmra.mxu0 %v1986
        %v2338 = vpop.f32.mrf.mxu0
        %v2339 = vadd.f32 %v2007, %v2338
        %v2340 = vpop.f32.mrf.mxu0
        %v2341 = vadd.f32 %v2007, %v2340
        %2342 = vmatmul.bf16.gmra.mxu0 %v1987
        %v2343 = vpop.f32.mrf.mxu0
        %v2344 = vadd.f32 %v2007, %v2343
        %v2345 = vpop.f32.mrf.mxu0
        %v2346 = vadd.f32 %v2007, %v2345
        %2347 = vdwg.mxu0
        %2348 = vst [vmem:[%s373] sm:$0xff] %v2100
        %2349 = vst [vmem:[%s373 + $0x8] sm:$0xff] %v2102
        %2350 = vst [vmem:[%s373 + $0x10] sm:$0xff] %v2105
        %2351 = vst [vmem:[%s373 + $0x18] sm:$0xff] %v2107
        %2352 = vst [vmem:[%s373 + $0x20] sm:$0xff] %v2110
        %2353 = vst [vmem:[%s373 + $0x28] sm:$0xff] %v2112
        %2354 = vst [vmem:[%s373 + $0x30] sm:$0xff] %v2115
        %2355 = vst [vmem:[%s373 + $0x38] sm:$0xff] %v2117
        %2356 = vst [vmem:[%s373 + $0x40] sm:$0xff] %v2120
        %2357 = vst [vmem:[%s373 + $0x48] sm:$0xff] %v2122
        %2358 = vst [vmem:[%s373 + $0x50] sm:$0xff] %v2125
        %2359 = vst [vmem:[%s373 + $0x58] sm:$0xff] %v2127
        %2360 = vst [vmem:[%s373 + $0x60] sm:$0xff] %v2130
        %2361 = vst [vmem:[%s373 + $0x68] sm:$0xff] %v2132
        %2362 = vst [vmem:[%s373 + $0x70] sm:$0xff] %v2135
        %2363 = vst [vmem:[%s373 + $0x78] sm:$0xff] %v2137
        %2364 = vst [vmem:[%s373 + $0x80] sm:$0xff] %v2140
        %2365 = vst [vmem:[%s373 + $0x88] sm:$0xff] %v2142
        %2366 = vst [vmem:[%s373 + $0x90] sm:$0xff] %v2145
        %2367 = vst [vmem:[%s373 + $0x98] sm:$0xff] %v2147
        %2368 = vst [vmem:[%s373 + $0xa0] sm:$0xff] %v2150
        %2369 = vst [vmem:[%s373 + $0xa8] sm:$0xff] %v2152
        %2370 = vst [vmem:[%s373 + $0xb0] sm:$0xff] %v2155
        %2371 = vst [vmem:[%s373 + $0xb8] sm:$0xff] %v2157
        %2372 = vst [vmem:[%s373 + $0xc0] sm:$0xff] %v2160
        %2373 = vst [vmem:[%s373 + $0xc8] sm:$0xff] %v2162
        %2374 = vst [vmem:[%s373 + $0xd0] sm:$0xff] %v2165
        %2375 = vst [vmem:[%s373 + $0xd8] sm:$0xff] %v2167
        %2376 = vst [vmem:[%s373 + $0xe0] sm:$0xff] %v2170
        %2377 = vst [vmem:[%s373 + $0xe8] sm:$0xff] %v2172
        %2378 = vst [vmem:[%s373 + $0xf0] sm:$0xff] %v2175
        %2379 = vst [vmem:[%s373 + $0xf8] sm:$0xff] %v2177
        %2380 = vst [vmem:[%s373 + $0x100] sm:$0xff] %v2180
        %2381 = vst [vmem:[%s373 + $0x108] sm:$0xff] %v2182
        %2382 = vst [vmem:[%s373 + $0x110] sm:$0xff] %v2185
        %2383 = vst [vmem:[%s373 + $0x118] sm:$0xff] %v2187
        %2384 = vst [vmem:[%s373 + $0x120] sm:$0xff] %v2190
        %2385 = vst [vmem:[%s373 + $0x128] sm:$0xff] %v2192
        %2386 = vst [vmem:[%s373 + $0x130] sm:$0xff] %v2195
        %2387 = vst [vmem:[%s373 + $0x138] sm:$0xff] %v2197
        %2388 = vst [vmem:[%s373 + $0x140] sm:$0xff] %v2200
        %2389 = vst [vmem:[%s373 + $0x148] sm:$0xff] %v2202
        %2390 = vst [vmem:[%s373 + $0x150] sm:$0xff] %v2205
        %2391 = vst [vmem:[%s373 + $0x158] sm:$0xff] %v2207
        %2392 = vst [vmem:[%s373 + $0x160] sm:$0xff] %v2210
        %2393 = vst [vmem:[%s373 + $0x168] sm:$0xff] %v2212
        %2394 = vst [vmem:[%s373 + $0x170] sm:$0xff] %v2215
        %2395 = vst [vmem:[%s373 + $0x178] sm:$0xff] %v2217
        %v2396 = vmax.f32 %v2229, 0.0
        %v2397 = vmax.f32 %v2231, 0.0
        %v2398 = vmax.f32 %v2234, 0.0
        %v2399 = vmax.f32 %v2236, 0.0
        %v2400 = vmax.f32 %v2239, 0.0
        %v2401 = vmax.f32 %v2241, 0.0
        %v2402 = vmax.f32 %v2244, 0.0
        %v2403 = vmax.f32 %v2246, 0.0
        %v2404 = vmax.f32 %v2249, 0.0
        %v2405 = vmax.f32 %v2251, 0.0
        %v2406 = vmax.f32 %v2254, 0.0
        %v2407 = vmax.f32 %v2256, 0.0
        %v2408 = vmax.f32 %v2259, 0.0
        %v2409 = vmax.f32 %v2261, 0.0
        %v2410 = vmax.f32 %v2264, 0.0
        %v2411 = vmax.f32 %v2266, 0.0
        %v2412 = vmax.f32 %v2269, 0.0
        %v2413 = vmax.f32 %v2271, 0.0
        %v2414 = vmax.f32 %v2274, 0.0
        %v2415 = vmax.f32 %v2276, 0.0
        %v2416 = vmax.f32 %v2279, 0.0
        %v2417 = vmax.f32 %v2281, 0.0
        %v2418 = vmax.f32 %v2284, 0.0
        %v2419 = vmax.f32 %v2286, 0.0
        %v2420 = vmax.f32 %v2289, 0.0
        %v2421 = vmax.f32 %v2291, 0.0
        %v2422 = vmax.f32 %v2294, 0.0
        %v2423 = vmax.f32 %v2296, 0.0
        %v2424 = vmax.f32 %v2299, 0.0
        %v2425 = vmax.f32 %v2301, 0.0
        %v2426 = vmax.f32 %v2304, 0.0
        %v2427 = vmax.f32 %v2306, 0.0
        %v2428 = vmax.f32 %v2309, 0.0
        %v2429 = vmax.f32 %v2311, 0.0
        %v2430 = vmax.f32 %v2314, 0.0
        %v2431 = vmax.f32 %v2316, 0.0
        %v2432 = vmax.f32 %v2319, 0.0
        %v2433 = vmax.f32 %v2321, 0.0
        %v2434 = vmax.f32 %v2324, 0.0
        %v2435 = vmax.f32 %v2326, 0.0
        %v2436 = vmax.f32 %v2329, 0.0
        %v2437 = vmax.f32 %v2331, 0.0
        %v2438 = vmax.f32 %v2334, 0.0
        %v2439 = vmax.f32 %v2336, 0.0
        %v2440 = vmax.f32 %v2339, 0.0
        %v2441 = vmax.f32 %v2341, 0.0
        %v2442 = vmax.f32 %v2344, 0.0
        %v2443 = vmax.f32 %v2346, 0.0
        %v2444 = vpack.c.bf16 %v2397, %v2396
        %v2445 = vpack.c.bf16 %v2399, %v2398
        %v2446 = vpack.c.bf16 %v2401, %v2400
        %v2447 = vpack.c.bf16 %v2403, %v2402
        %v2448 = vpack.c.bf16 %v2405, %v2404
        %v2449 = vpack.c.bf16 %v2407, %v2406
        %v2450 = vpack.c.bf16 %v2409, %v2408
        %v2451 = vpack.c.bf16 %v2411, %v2410
        %v2452 = vpack.c.bf16 %v2413, %v2412
        %v2453 = vpack.c.bf16 %v2415, %v2414
        %v2454 = vpack.c.bf16 %v2417, %v2416
        %v2455 = vpack.c.bf16 %v2419, %v2418
        %v2456 = vpack.c.bf16 %v2421, %v2420
        %v2457 = vpack.c.bf16 %v2423, %v2422
        %v2458 = vpack.c.bf16 %v2425, %v2424
        %v2459 = vpack.c.bf16 %v2427, %v2426
        %v2460 = vpack.c.bf16 %v2429, %v2428
        %v2461 = vpack.c.bf16 %v2431, %v2430
        %v2462 = vpack.c.bf16 %v2433, %v2432
        %v2463 = vpack.c.bf16 %v2435, %v2434
        %v2464 = vpack.c.bf16 %v2437, %v2436
        %v2465 = vpack.c.bf16 %v2439, %v2438
        %v2466 = vpack.c.bf16 %v2441, %v2440
        %v2467 = vpack.c.bf16 %v2443, %v2442
        %v2468 = vld [vmem:[%s7] sm:$0xf]
        %2469 = vmatpush.bf16.xpose.msra.mxu0 %v2451
        %2470 = vmatpush.bf16.xpose.msra.mxu0 %v2450
        %2471 = vmatpush.bf16.xpose.msra.mxu0 %v2449
        %2472 = vmatpush.bf16.xpose.msra.mxu0 %v2448
        %2473 = vmatpush.bf16.xpose.msra.mxu0 %v2447
        %2474 = vmatpush.bf16.xpose.msra.mxu0 %v2446
        %2475 = vmatpush.bf16.xpose.msra.mxu0 %v2445
        %2476 = vmatpush.bf16.xpose.msra.mxu0 %v2444
        %2477 = vmatmul.bf16.gmra.mxu0 %v2468
        %v2478 = vpop.f32.mrf.mxu0
        %v2479 = vadd.f32 0.0, %v2478
        %v2480 = vpop.f32.mrf.mxu0
        %2481 = vdwg.mxu0
        %2482 = vmatpush.bf16.xpose.msra.mxu0 %v2459
        %2483 = vmatpush.bf16.xpose.msra.mxu0 %v2458
        %2484 = vmatpush.bf16.xpose.msra.mxu0 %v2457
        %2485 = vmatpush.bf16.xpose.msra.mxu0 %v2456
        %2486 = vmatpush.bf16.xpose.msra.mxu0 %v2455
        %2487 = vmatpush.bf16.xpose.msra.mxu0 %v2454
        %2488 = vmatpush.bf16.xpose.msra.mxu0 %v2453
        %2489 = vmatpush.bf16.xpose.msra.mxu0 %v2452
        %2490 = vmatmul.bf16.gmra.mxu0 %v2468
        %v2491 = vpop.f32.mrf.mxu0
        %v2492 = vadd.f32 0.0, %v2491
        %v2493 = vpop.f32.mrf.mxu0
        %2494 = vdwg.mxu0
        %2495 = vmatpush.bf16.xpose.msra.mxu0 %v2467
        %2496 = vmatpush.bf16.xpose.msra.mxu0 %v2466
        %2497 = vmatpush.bf16.xpose.msra.mxu0 %v2465
        %2498 = vmatpush.bf16.xpose.msra.mxu0 %v2464
        %2499 = vmatpush.bf16.xpose.msra.mxu0 %v2463
        %2500 = vmatpush.bf16.xpose.msra.mxu0 %v2462
        %2501 = vmatpush.bf16.xpose.msra.mxu0 %v2461
        %2502 = vmatpush.bf16.xpose.msra.mxu0 %v2460
        %2503 = vmatmul.bf16.gmra.mxu0 %v2468
        %v2504 = vpop.f32.mrf.mxu0
        %v2505 = vadd.f32 0.0, %v2504
        %v2506 = vpop.f32.mrf.mxu0
        %2507 = vdwg.mxu0
        %s2508 = sld [smem:[#allocation2]]
        %v2509 = vstv %s2508
        %v2510 = vadd.f32 %v2479, %v2509
        %v2511 = vadd.f32 %v2492, %v2509
        %v2512 = vadd.f32 %v2505, %v2509
        %v2516 = vrot.slane %v2511, 7
        %v2517 = vrot.slane %v2512, 6
        %vm2518 = vcmask 1040384
        %v2519 = vsel %vm2518, %v2510, %v2516
        %vm2520 = vcmask 1041408
        %v2521 = vsel %vm2520, %v2519, %v2517
        %v2523 = vlaneseq
        %vm2524 = vcmp.ge.s32.totalorder %v2523, 0
        %vm2525 = vcmp.lt.s32.totalorder %v2523, 384
        %vm2526 = vmand %vm2524, %vm2525
        %2527 = vst.msk [vmem:[%s391] sm:$0x7] %vm2526, %v2521
        %p2528 = scmp.lt.s32.totalorder %s26, 1
        %s2529 = scalar_select %p2528, %s26, 1
        %s2530 = smul.addr %s2529, 3
        %s2531 = scalar_lea.vmem %s9, %s2530
        %s2532 = sand.u32 %s254, 1
        %s2533 = scalar_lea.sflag [#allocation4], %s2532
        %s2534 = sand.u32 %s254, 1
        %s2535 = smul.addr %s2534, 384
        %s2536 = scalar_lea.vmem [#allocation3], %s2535
        // Predicated region
        $region57: #{hetnet_forward.1} parent=55 // pred_check
          %p2537 = pneg %p238
        $region58: #{hetnet_forward.1} parent=55 // pred_check_branch
          %2539 = sbr.rel (%p2537) target = $region60
        $region59: #{hetnet_forward.1} parent=55 // pred_region
          _
        $region60: #{hetnet_forward.1} parent=55 // pred_fallthru
          _
        // Predicated region
        $region61: #{hetnet_forward.1} parent=55 // pred_check
          %p2540 = pneg %p264
        $region62: #{hetnet_forward.1} parent=55 // pred_check_branch
          %2542 = sbr.rel (%p2540) target = $region64
        $region63: #{hetnet_forward.1} parent=55 // pred_region
          %s2543 = smul.u32 48, %s26
          %s2544 = ssub.s32 75, %s2543
          %p2545 = scmp.lt.s32.totalorder %s2544, 48
          %s2546 = scalar_select %p2545, %s2544, 48
          %s2547 = smul.u32 8, %s2546
          %s2548 = ssub.s32 384, %s2547
          %s2549 = sshll.u32 %s2548, 4
          %2550 = vsyncadd %s2533, %s2549
          %p2551 = scmp.ne.s32.totalorder 0, %s2547
          %s2552 = smul.addr %s2543, 8
          %s2553 = scalar_lea.hbm %s10, %s2552
          %s2554 = smul.u32 8, %s2546
          %s2555 = sshll.u32 %s2536, 4
          %s2556 = int_to_ptr.vmem [resolvable:$true] %s2555
          %s2557 = sshll.u32 %s2553, 4
          %s2558 = int_to_ptr.hbm [resolvable:$true] %s2557
          %s2559 = sshll.u32 %s2554, 4
          %2563 = dma.vmem_to_hbm [thread:$0]  (%p2551), %s2556, %s2559, %s2558, %s2533, 128, 128, 8
        $region64: #{hetnet_forward.1} parent=55 // pred_fallthru
          _
      $region56: #{hetnet_forward.1} parent=5 // pred_fallthru
        _
      %p2564 = scmp.le.s32.totalorder 2, %s21
      // Predicated region
      $region65: #{hetnet_forward.1} parent=5 // pred_check
        %p2565 = pneg %p2564
      $region66: #{hetnet_forward.1} parent=5 // pred_check_branch
        %2567 = sbr.rel (%p2565) target = $region68
      $region67: #{hetnet_forward.1} parent=5 // pred_region
        %s2568 = ssub.s32 %s21, 2
        // Predicated region
        $region69: #{hetnet_forward.1} parent=67 // pred_check
          %p2569 = pneg %p244
        $region70: #{hetnet_forward.1} parent=67 // pred_check_branch
          %2571 = sbr.rel (%p2569) target = $region72
        $region71: #{hetnet_forward.1} parent=67 // pred_region
          %p2572 = scmp.lt.s32.totalorder %s27, 1
          %s2573 = scalar_select %p2572, %s27, 1
          %s2574 = smul.addr %s2573, 3
          %s2575 = scalar_lea.vmem %s9, %s2574
        $region72: #{hetnet_forward.1} parent=67 // pred_fallthru
          _
        // Predicated region
        $region73: #{hetnet_forward.1} parent=67 // pred_check
          %p2576 = pneg %p270
        $region74: #{hetnet_forward.1} parent=67 // pred_check_branch
          %2578 = sbr.rel (%p2576) target = $region76
        $region75: #{hetnet_forward.1} parent=67 // pred_region
          %s2579 = sand.u32 %s255, 1
          %s2580 = scalar_lea.sflag [#allocation4], %s2579
          %s2581 = sand.u32 %s255, 1
          %s2582 = smul.addr %s2581, 384
          %s2583 = scalar_lea.vmem [#allocation3], %s2582
          %2585 = dma.done %s2580, 6144
        $region76: #{hetnet_forward.1} parent=67 // pred_fallthru
          _
      $region68: #{hetnet_forward.1} parent=5 // pred_fallthru
        _
    $region6: #{hetnet_forward.1} parent=1 // loop_footer
      %s25 = sadd.s32 1, %s21
    $region7: #{hetnet_forward.1} parent=1 // loop_footer_branch
      %20 = sbr.rel target = $region3
    $region8: #{hetnet_forward.1} parent=1 // loop_exit
      _
    %2586 = vsyncpa [#allocation4], 1
    %s2587 = scalar_lea.sflag [#allocation4], 1
    %2588 = vsyncpa %s2587, 1

</llo_original>
